<compile_context>
chip_gen: v6e
topology: v6e:2x2x1
jax: 0.10.0
libtpu: 0.0.40
codegen_flags: <defaults>
</compile_context>

<pallas_src>
import functools

import jax
import jax.numpy as jnp
from jax import lax
from jax.experimental import pallas as pl
from jax.experimental.pallas import tpu as pltpu

_LANES = 128


# ---------------- faithful ports of the PyTorch helper functions ----------------
def get_padding_shape(filter_shape, stride):
    def _pad_top_bottom(filter_dim, stride_val):
        pad_along = max(filter_dim - stride_val, 0)
        pad_top = pad_along // 2
        pad_bottom = pad_along - pad_top
        return pad_top, pad_bottom

    padding_shape = []
    for filter_dim, stride_val in zip(filter_shape, stride):
        pad_top, pad_bottom = _pad_top_bottom(filter_dim, stride_val)
        padding_shape.append(pad_top)
        padding_shape.append(pad_bottom)
    depth_top = padding_shape.pop(0)
    depth_bottom = padding_shape.pop(0)
    padding_shape.append(depth_top)
    padding_shape.append(depth_bottom)
    return tuple(padding_shape)


def simplify_padding(padding_shapes):
    all_same = True
    padding_init = padding_shapes[0]
    for pad in padding_shapes[1:]:
        if pad != padding_init:
            all_same = False
    return all_same, padding_init


def _round_up(x, m):
    return ((x + m - 1) // m) * m


# ------------------------------ Pallas kernel ------------------------------
def _conv_bn_relu_kernel(x_ref, w_ref, scale_ref, shift_ref, o_ref, acc_ref, *,
                         kd_size, kh_size, kw_taps, wp, m_rows, use_relu):
    """Grid step (n, od, kd): accumulate the kd-th depth tap of the 3D conv.

    x_ref:     (1, 1, L_in, K)            one padded depth slice, (H,W) flattened (bf16)
                                          K = KW*Cin when KW is folded, else Cin
    w_ref:     (KD*KH*kw_taps, K, Cout_p) full filter bank, resident in VMEM (bf16)
    scale_ref: (1, Cout_p)                folded BN scale (f32)
    shift_ref: (1, Cout_p)                folded BN shift (+bias) (f32)
    o_ref:     (1, 1, M, Cout_p)          stride-1 "wide" output rows for (n, od)
    acc_ref:   (M, Cout_p) f32            VMEM accumulator carried across kd (KD > 1)
    """
    kd = pl.program_id(2)

    # Register-accumulate the KH (x kw_taps) taps of this depth slice, then commit
    # to the VMEM accumulator once.
    partial = None
    for kh in range(kh_size):
        for kw in range(kw_taps):
            r0 = kh * wp + kw
            xs = x_ref[0, 0, r0:r0 + m_rows, :]                       # (M, K) bf16
            wt = w_ref[(kd * kh_size + kh) * kw_taps + kw]            # (K, Cout_p)
            t = jnp.dot(xs, wt, preferred_element_type=jnp.float32)
            partial = t if partial is None else partial + t

    def _finalize(acc):
        y = acc * scale_ref[...] + shift_ref[...]
        if use_relu:
            y = jnp.maximum(y, 0.0)
        o_ref[0, 0] = y.astype(o_ref.dtype)

    if kd_size == 1:
        # No depth reduction: skip the VMEM accumulator round-trip entirely.
        _finalize(partial)
    else:
        @pl.when(kd == 0)
        def _():
            acc_ref[...] = partial

        @pl.when(kd != 0)
        def _():
            acc_ref[...] += partial

        @pl.when(kd == kd_size - 1)
        def _():
            _finalize(acc_ref[...])


# ------------------------------ module wrapper ------------------------------
class Unit3DpyPallas:
    """Pallas/TPU re-implementation of models/layers.py::Unit3Dpy forward."""

    def __init__(self, in_channels, out_channels, kernel_size=(1, 1, 1),
                 stride=(1, 1, 1), activation='relu', padding='SAME',
                 use_bias=False, use_bn=True, key=None):
        if key is None:
            key = jax.random.PRNGKey(0)
        self.in_channels = in_channels
        self.out_channels = out_channels
        self.kernel_size = tuple(kernel_size)
        self.stride = tuple(stride)
        self.activation = activation
        self.use_bias = use_bias
        self.use_bn = use_bn
        self.padding = padding
        self.eps = 1e-5  # torch.nn.BatchNorm3d default

        # --- padding resolution, faithful to the PyTorch module (incl. its H/W quirk) ---
        if padding == 'SAME':
            ps = get_padding_shape(kernel_size, stride)  # (h0, h1, w0, w1, d0, d1)
            all_same, p = simplify_padding(ps)
            if all_same:
                self.pads = ((p, p), (p, p), (p, p))
            else:
                # ConstantPad3d(ps, 0): W <- ps[0:2], H <- ps[2:4], D <- ps[4:6]
                self.pads = ((ps[4], ps[5]), (ps[2], ps[3]), (ps[0], ps[1]))
        elif padding == 'VALID':
            self.pads = ((0, 0), (0, 0), (0, 0))
        else:
            raise ValueError('padding should be in [VALID|SAME] but got {}'.format(padding))

        # --- deterministic synthetic parameters ---
        k1, k2, k3, k4, k5, k6 = jax.random.split(key, 6)
        KD, KH, KW = self.kernel_size
        # conv weight in torch layout (Cout, Cin, KD, KH, KW)
        self.weight = 0.1 * jax.random.normal(
            k1, (out_channels, in_channels, KD, KH, KW), jnp.float32)
        self.bias = (0.1 * jax.random.normal(k2, (out_channels,), jnp.float32)
                     if use_bias else None)
        # BatchNorm3d parameters / running stats (inference mode)
        self.gamma = 1.0 + 0.1 * jax.random.normal(k3, (out_channels,), jnp.float32)
        self.beta = 0.1 * jax.random.normal(k4, (out_channels,), jnp.float32)
        self.running_mean = 0.1 * jax.random.normal(k5, (out_channels,), jnp.float32)
        self.running_var = 1.0 + 0.5 * jax.random.uniform(k6, (out_channels,),
                                                          jnp.float32)

    def _folded_scale_shift(self):
        if self.use_bn:
            scale = self.gamma / jnp.sqrt(self.running_var + self.eps)
            shift = self.beta - self.running_mean * scale
        else:
            scale = jnp.ones((self.out_channels,), jnp.float32)
            shift = jnp.zeros((self.out_channels,), jnp.float32)
        if self.use_bias:
            shift = shift + self.bias * scale
        return scale, shift

    def __call__(self, x):
        """x: (N, Cin, D, H, W) float32  ->  (N, Cout, Do, Ho, Wo) float32."""
        N, Cin, D, H, W = x.shape
        assert Cin == self.in_channels
        KD, KH, KW = self.kernel_size
        sd, sh, sw = self.stride
        (pd0, pd1), (ph0, ph1), (pw0, pw1) = self.pads

        # --- wrapper glue: pad, channels-last, bf16, flatten (H, W) ---
        x_pad = jnp.pad(x, ((0, 0), (0, 0), (pd0, pd1), (ph0, ph1), (pw0, pw1)))
        x_pad = jnp.transpose(x_pad, (0, 2, 3, 4, 1)).astype(jnp.bfloat16)
        _, Dp, Hp, Wp, _ = x_pad.shape
        Do = (Dp - KD) // sd + 1
        Ho = (Hp - KH) // sh + 1
        Wo = (Wp - KW) // sw + 1
        Ho_full = Hp - KH + 1            # stride-1 H output rows (decimated later)
        M = Ho_full * Wp                 # "wide" output rows per (n, od)
        Cout = self.out_channels
        Cout_pad = _round_up(Cout, _LANES)

        # Fold KW into the contraction dim when Cin underfills the 128 MXU lanes.
        fold_kw = (KW > 1) and (Cin < _LANES)
        kw_taps = 1 if fold_kw else KW
        kdim = (KW * Cin) if fold_kw else Cin

        HW = Hp * Wp
        x_flat = x_pad.reshape(N, Dp, HW, Cin)
        if fold_kw:
            x_flat = jnp.pad(x_flat, ((0, 0), (0, 0), (0, KW - 1), (0, 0)))
            x_flat = jnp.concatenate(
                [x_flat[:, :, kw:kw + HW, :] for kw in range(KW)], axis=-1)
            L_in = _round_up(HW, 8)
        else:
            L_in = _round_up(HW + KW - 1, 8)
        x_flat = jnp.pad(x_flat, ((0, 0), (0, 0), (0, L_in - x_flat.shape[2]), (0, 0)))

        # weight: (Cout, Cin, KD, KH, KW) -> (KD*KH*kw_taps, kdim, Cout_pad), bf16
        w = jnp.transpose(self.weight, (2, 3, 4, 1, 0))          # (KD,KH,KW,Cin,Cout)
        w = jnp.pad(w, ((0, 0), (0, 0), (0, 0), (0, 0), (0, Cout_pad - Cout)))
        w = w.reshape(KD * KH * kw_taps, kdim, Cout_pad).astype(jnp.bfloat16)

        scale, shift = self._folded_scale_shift()
        scale2d = jnp.pad(scale, (0, Cout_pad - Cout)).reshape(1, Cout_pad).astype(jnp.float32)
        shift2d = jnp.pad(shift, (0, Cout_pad - Cout)).reshape(1, Cout_pad).astype(jnp.float32)

        kernel = functools.partial(
            _conv_bn_relu_kernel,
            kd_size=KD, kh_size=KH, kw_taps=kw_taps,
            wp=Wp, m_rows=M,
            use_relu=(self.activation is not None),
        )

        # accumulator only needed when KD > 1 (tiny dummy otherwise)
        acc_shape = (M, Cout_pad) if KD > 1 else (8, _LANES)

        out_wide = pl.pallas_call(
            kernel,
            out_shape=jax.ShapeDtypeStruct((N, Do, M, Cout_pad), jnp.float32),
            grid=(N, Do, KD),
            in_specs=[
                # one padded depth slice per step (never the whole sample)
                pl.BlockSpec((1, 1, L_in, kdim),
                             lambda n, od, kd: (n, od * sd + kd, 0, 0)),
                # full filter bank, resident (constant block index -> single DMA)
                pl.BlockSpec((KD * KH * kw_taps, kdim, Cout_pad),
                             lambda n, od, kd: (0, 0, 0)),
                pl.BlockSpec((1, Cout_pad), lambda n, od, kd: (0, 0)),
                pl.BlockSpec((1, Cout_pad), lambda n, od, kd: (0, 0)),
            ],
            out_specs=pl.BlockSpec((1, 1, M, Cout_pad),
                                   lambda n, od, kd: (n, od, 0, 0)),
            scratch_shapes=[pltpu.VMEM(acc_shape, jnp.float32)],
            compiler_params=pltpu.CompilerParams(
                dimension_semantics=("parallel", "parallel", "arbitrary")),
        )(x_flat, w, scale2d, shift2d)

        # un-flatten, drop garbage columns, decimate by stride, drop Cout padding
        out = out_wide.reshape(N, Do, Ho_full, Wp, Cout_pad)
        out = out[:, :, ::sh, ::sw, :Cout][:, :, :Ho, :Wo, :]
        return jnp.transpose(out, (0, 4, 1, 2, 3))  # back to NCDHW

    # pure-JAX reference for verification (f32, eval-mode BN)
    def reference(self, x):
        dn = lax.conv_dimension_numbers(x.shape, self.weight.shape,
                                        ('NCDHW', 'OIDHW', 'NCDHW'))
        y = lax.conv_general_dilated(x, self.weight, window_strides=self.stride,
                                     padding=list(self.pads),
                                     dimension_numbers=dn)
        if self.use_bias:
            y = y + self.bias[None, :, None, None, None]
        if self.use_bn:
            scale = self.gamma / jnp.sqrt(self.running_var + self.eps)
            shift = self.beta - self.running_mean * scale
            y = y * scale[None, :, None, None, None] + shift[None, :, None, None, None]
        if self.activation is not None:
            y = jnp.maximum(y, 0.0)
        return y


def _check(unit, x, atol=5e-2, rtol=5e-2):
    out = jax.block_until_ready(unit(x))
    ref = unit.reference(x)
    assert out.shape == ref.shape, (out.shape, ref.shape)
    err = float(jnp.max(jnp.abs(out - ref)))
    assert jnp.allclose(out, ref, atol=atol, rtol=rtol), err


if __name__ == "__main__":
    base = jax.random.PRNGKey(0)
    k_a, k_b, k_c, kx1, kx2, kx3 = jax.random.split(base, 6)

    # A: 3x3x3 SAME, stride 1 (the common I3D case, KW-folded path)
    unit_a = Unit3DpyPallas(4, 8, kernel_size=(3, 3, 3), stride=(1, 1, 1),
                            activation='relu', padding='SAME',
                            use_bias=False, use_bn=True, key=k_a)
    x_a = jax.random.normal(kx1, (2, 4, 8, 12, 16), jnp.float32)
    _check(unit_a, x_a)

    # B: 1x1x1 SAME, stride 1, with conv bias (KD == 1 fast path)
    unit_b = Unit3DpyPallas(8, 16, kernel_size=(1, 1, 1), stride=(1, 1, 1),
                            activation='relu', padding='SAME',
                            use_bias=True, use_bn=True, key=k_b)
    x_b = jax.random.normal(kx2, (2, 8, 6, 10, 12), jnp.float32)
    _check(unit_b, x_b)

    # C: 3x3x3 SAME, stride 2 (non-simplified ConstantPad3d path + stride decimation)
    unit_c = Unit3DpyPallas(4, 8, kernel_size=(3, 3, 3), stride=(2, 2, 2),
                            activation='relu', padding='SAME',
                            use_bias=False, use_bn=True, key=k_c)
    x_c = jax.random.normal(kx3, (1, 4, 7, 9, 11), jnp.float32)
    _check(unit_c, x_c)

    print("KERNEL_OK")
</pallas_src>

<mosaic_0001>
module attributes {stable_mosaic.version = 11 : i64} {
  func.func @_conv_bn_relu_kernel(%arg0: i32, %arg1: i32, %arg2: i32, %arg3: memref<1x1x256x12xbf16, #tpu.memory_space<vmem>>, %arg4: memref<9x12x128xbf16, #tpu.memory_space<vmem>>, %arg5: memref<1x128xf32, #tpu.memory_space<vmem>>, %arg6: memref<1x128xf32, #tpu.memory_space<vmem>>, %arg7: memref<1x1x216x128xf32, #tpu.memory_space<vmem>>, %arg8: memref<216x128xf32, #tpu.memory_space<vmem>>) attributes {dimension_semantics = [#tpu.dimension_semantics<parallel>, #tpu.dimension_semantics<parallel>, #tpu.dimension_semantics<arbitrary>], iteration_bounds = array<i64: 2, 8, 3>, scalar_prefetch = 0 : i64, scratch_operands = 1 : i64, tpu.core_type = #tpu.core_type<tc>, window_params = [{transform_indices = @transform_0, window_bounds = array<i64: 1, 1, 256, 12>}, {pipeline_mode = #tpu.pipeline_mode<synchronous>, transform_indices = @transform_1, window_bounds = array<i64: 9, 12, 128>}, {pipeline_mode = #tpu.pipeline_mode<synchronous>, transform_indices = @transform_2, window_bounds = array<i64: 1, 128>}, {pipeline_mode = #tpu.pipeline_mode<synchronous>, transform_indices = @transform_3, window_bounds = array<i64: 1, 128>}, {transform_indices = @transform_4, window_bounds = array<i64: 1, 1, 216, 128>}]} {
    %c0 = arith.constant 0 : index
    %c0_0 = arith.constant 0 : index
    %c0_1 = arith.constant 0 : index
    %c0_2 = arith.constant 0 : index
    %0 = vector.load %arg3[%c0, %c0_0, %c0_1, %c0_2] : memref<1x1x256x12xbf16, #tpu.memory_space<vmem>>, vector<1x1x216x12xbf16>
    %1 = vector.shape_cast %0 : vector<1x1x216x12xbf16> to vector<216x12xbf16>
    %c3_i32 = arith.constant 3 : i32
    %2 = arith.muli %arg2, %c3_i32 : i32
    %c0_i32 = arith.constant 0 : i32
    %3 = arith.addi %2, %c0_i32 : i32
    %c1_i32 = arith.constant 1 : i32
    %4 = arith.muli %3, %c1_i32 : i32
    %c0_i32_3 = arith.constant 0 : i32
    %5 = arith.addi %4, %c0_i32_3 : i32
    %6 = arith.index_cast %5 : i32 to index
    %c0_4 = arith.constant 0 : index
    %c0_5 = arith.constant 0 : index
    %7 = vector.load %arg4[%6, %c0_4, %c0_5] : memref<9x12x128xbf16, #tpu.memory_space<vmem>>, vector<1x12x128xbf16>
    %8 = vector.shape_cast %7 : vector<1x12x128xbf16> to vector<12x128xbf16>
    %cst = arith.constant dense<0.000000e+00> : vector<216x128xf32>
    %9 = tpu.matmul %1, %8, %cst {dimension_numbers = #tpu.dot_dimension_numbers<[1], [0], [0], [1], [0, 0, 1, 1], [], []>} : vector<216x12xbf16>, vector<12x128xbf16>, vector<216x128xf32> -> vector<216x128xf32>
    %c0_6 = arith.constant 0 : index
    %c0_7 = arith.constant 0 : index
    %c18 = arith.constant 18 : index
    %c0_8 = arith.constant 0 : index
    %10 = vector.load %arg3[%c0_6, %c0_7, %c18, %c0_8] : memref<1x1x256x12xbf16, #tpu.memory_space<vmem>>, vector<1x1x216x12xbf16>
    %11 = vector.shape_cast %10 : vector<1x1x216x12xbf16> to vector<216x12xbf16>
    %c3_i32_9 = arith.constant 3 : i32
    %12 = arith.muli %arg2, %c3_i32_9 : i32
    %c1_i32_10 = arith.constant 1 : i32
    %13 = arith.addi %12, %c1_i32_10 : i32
    %c1_i32_11 = arith.constant 1 : i32
    %14 = arith.muli %13, %c1_i32_11 : i32
    %c0_i32_12 = arith.constant 0 : i32
    %15 = arith.addi %14, %c0_i32_12 : i32
    %16 = arith.index_cast %15 : i32 to index
    %c0_13 = arith.constant 0 : index
    %c0_14 = arith.constant 0 : index
    %17 = vector.load %arg4[%16, %c0_13, %c0_14] : memref<9x12x128xbf16, #tpu.memory_space<vmem>>, vector<1x12x128xbf16>
    %18 = vector.shape_cast %17 : vector<1x12x128xbf16> to vector<12x128xbf16>
    %cst_15 = arith.constant dense<0.000000e+00> : vector<216x128xf32>
    %19 = tpu.matmul %11, %18, %cst_15 {dimension_numbers = #tpu.dot_dimension_numbers<[1], [0], [0], [1], [0, 0, 1, 1], [], []>} : vector<216x12xbf16>, vector<12x128xbf16>, vector<216x128xf32> -> vector<216x128xf32>
    %20 = arith.addf %9, %19 : vector<216x128xf32>
    %c0_16 = arith.constant 0 : index
    %c0_17 = arith.constant 0 : index
    %c36 = arith.constant 36 : index
    %c0_18 = arith.constant 0 : index
    %21 = vector.load %arg3[%c0_16, %c0_17, %c36, %c0_18] : memref<1x1x256x12xbf16, #tpu.memory_space<vmem>>, vector<1x1x216x12xbf16>
    %22 = vector.shape_cast %21 : vector<1x1x216x12xbf16> to vector<216x12xbf16>
    %c3_i32_19 = arith.constant 3 : i32
    %23 = arith.muli %arg2, %c3_i32_19 : i32
    %c2_i32 = arith.constant 2 : i32
    %24 = arith.addi %23, %c2_i32 : i32
    %c1_i32_20 = arith.constant 1 : i32
    %25 = arith.muli %24, %c1_i32_20 : i32
    %c0_i32_21 = arith.constant 0 : i32
    %26 = arith.addi %25, %c0_i32_21 : i32
    %27 = arith.index_cast %26 : i32 to index
    %c0_22 = arith.constant 0 : index
    %c0_23 = arith.constant 0 : index
    %28 = vector.load %arg4[%27, %c0_22, %c0_23] : memref<9x12x128xbf16, #tpu.memory_space<vmem>>, vector<1x12x128xbf16>
    %29 = vector.shape_cast %28 : vector<1x12x128xbf16> to vector<12x128xbf16>
    %cst_24 = arith.constant dense<0.000000e+00> : vector<216x128xf32>
    %30 = tpu.matmul %22, %29, %cst_24 {dimension_numbers = #tpu.dot_dimension_numbers<[1], [0], [0], [1], [0, 0, 1, 1], [], []>} : vector<216x12xbf16>, vector<12x128xbf16>, vector<216x128xf32> -> vector<216x128xf32>
    %31 = arith.addf %20, %30 : vector<216x128xf32>
    %c0_i32_25 = arith.constant 0 : i32
    %32 = arith.cmpi eq, %arg2, %c0_i32_25 : i32
    %33 = arith.extui %32 : i1 to i32
    %c0_i32_26 = arith.constant 0 : i32
    %34 = arith.cmpi ne, %33, %c0_i32_26 : i32
    scf.if %34 {
      %c0_31 = arith.constant 0 : index
      %c0_32 = arith.constant 0 : index
      %41 = vector.load %arg8[%c0_31, %c0_32] : memref<216x128xf32, #tpu.memory_space<vmem>>, vector<216x128xf32>
      tpu.vector_store %arg8[%c0_31, %c0_32], %31 {strides = array<i32>} : memref<216x128xf32, #tpu.memory_space<vmem>>, vector<216x128xf32>,
    } else {
    }
    %c0_i32_27 = arith.constant 0 : i32
    %35 = arith.cmpi ne, %arg2, %c0_i32_27 : i32
    %36 = arith.extui %35 : i1 to i32
    %c0_i32_28 = arith.constant 0 : i32
    %37 = arith.cmpi ne, %36, %c0_i32_28 : i32
    scf.if %37 {
      %c0_31 = arith.constant 0 : index
      %c0_32 = arith.constant 0 : index
      %41 = vector.load %arg8[%c0_31, %c0_32] : memref<216x128xf32, #tpu.memory_space<vmem>>, vector<216x128xf32>
      %42 = arith.addf %41, %31 : vector<216x128xf32>
      %c0_33 = arith.constant 0 : index
      %c0_34 = arith.constant 0 : index
      %43 = vector.load %arg8[%c0_33, %c0_34] : memref<216x128xf32, #tpu.memory_space<vmem>>, vector<216x128xf32>
      tpu.vector_store %arg8[%c0_33, %c0_34], %42 {strides = array<i32>} : memref<216x128xf32, #tpu.memory_space<vmem>>, vector<216x128xf32>,
    } else {
    }
    %c2_i32_29 = arith.constant 2 : i32
    %38 = arith.cmpi eq, %arg2, %c2_i32_29 : i32
    %39 = arith.extui %38 : i1 to i32
    %c0_i32_30 = arith.constant 0 : i32
    %40 = arith.cmpi ne, %39, %c0_i32_30 : i32
    scf.if %40 {
      %c0_31 = arith.constant 0 : index
      %c0_32 = arith.constant 0 : index
      %41 = vector.load %arg8[%c0_31, %c0_32] : memref<216x128xf32, #tpu.memory_space<vmem>>, vector<216x128xf32>
      %c0_33 = arith.constant 0 : index
      %c0_34 = arith.constant 0 : index
      %42 = vector.load %arg5[%c0_33, %c0_34] : memref<1x128xf32, #tpu.memory_space<vmem>>, vector<1x128xf32>
      %43 = vector.broadcast %42 : vector<1x128xf32> to vector<216x128xf32>
      %44 = arith.mulf %41, %43 : vector<216x128xf32>
      %c0_35 = arith.constant 0 : index
      %c0_36 = arith.constant 0 : index
      %45 = vector.load %arg6[%c0_35, %c0_36] : memref<1x128xf32, #tpu.memory_space<vmem>>, vector<1x128xf32>
      %46 = vector.broadcast %45 : vector<1x128xf32> to vector<216x128xf32>
      %47 = arith.addf %44, %46 : vector<216x128xf32>
      %cst_37 = arith.constant 0.000000e+00 : f32
      %48 = vector.broadcast %cst_37 : f32 to vector<216x128xf32>
      %49 = arith.maximumf %47, %48 : vector<216x128xf32>
      %c0_38 = arith.constant 0 : index
      %c0_39 = arith.constant 0 : index
      %c0_40 = arith.constant 0 : index
      %c0_41 = arith.constant 0 : index
      %50 = vector.load %arg7[%c0_38, %c0_39, %c0_40, %c0_41] : memref<1x1x216x128xf32, #tpu.memory_space<vmem>>, vector<1x1x216x128xf32>
      %51 = vector.shape_cast %50 : vector<1x1x216x128xf32> to vector<216x128xf32>
      %52 = vector.shape_cast %49 : vector<216x128xf32> to vector<1x1x216x128xf32>
      tpu.vector_store %arg7[%c0_38, %c0_39, %c0_40, %c0_41], %52 {strides = array<i32>} : memref<1x1x216x128xf32, #tpu.memory_space<vmem>>, vector<1x1x216x128xf32>,
    } else {
    }
    return
  }
  func.func @transform_0(%arg0: i32, %arg1: i32, %arg2: i32) -> (i32, i32, i32, i32) {
    %c1_i32 = arith.constant 1 : i32
    %0 = arith.muli %arg1, %c1_i32 : i32
    %1 = arith.addi %0, %arg2 : i32
    %c0_i32 = arith.constant 0 : i32
    %c0_i32_0 = arith.constant 0 : i32
    %c0_i32_1 = arith.constant 0 : i32
    return %arg0, %1, %c0_i32, %c0_i32_0 : i32, i32, i32, i32
  }
  func.func @transform_1(%arg0: i32, %arg1: i32, %arg2: i32) -> (i32, i32, i32) {
    %c0_i32 = arith.constant 0 : i32
    %c0_i32_0 = arith.constant 0 : i32
    %c0_i32_1 = arith.constant 0 : i32
    %c0_i32_2 = arith.constant 0 : i32
    return %c0_i32, %c0_i32_0, %c0_i32_1 : i32, i32, i32
  }
  func.func @transform_2(%arg0: i32, %arg1: i32, %arg2: i32) -> (i32, i32) {
    %c0_i32 = arith.constant 0 : i32
    %c0_i32_0 = arith.constant 0 : i32
    %c0_i32_1 = arith.constant 0 : i32
    return %c0_i32, %c0_i32_0 : i32, i32
  }
  func.func @transform_3(%arg0: i32, %arg1: i32, %arg2: i32) -> (i32, i32) {
    %c0_i32 = arith.constant 0 : i32
    %c0_i32_0 = arith.constant 0 : i32
    %c0_i32_1 = arith.constant 0 : i32
    return %c0_i32, %c0_i32_0 : i32, i32
  }
  func.func @transform_4(%arg0: i32, %arg1: i32, %arg2: i32) -> (i32, i32, i32, i32) {
    %c0_i32 = arith.constant 0 : i32
    %c0_i32_0 = arith.constant 0 : i32
    %c0_i32_1 = arith.constant 0 : i32
    return %arg0, %arg1, %c0_i32, %c0_i32_0 : i32, i32, i32, i32
  }
}

</mosaic_0001>

<llo_original>
// kernel: tpu_custom_call.1
$region0: #{tpu_custom_call.1}
  #allocation0 [shape = 'u32[]', space=smem, size = 0x4, offset = 0x4, fixed_abs, tag = 'smem constant byte address 0x4 - core index']
  #allocation1 [shape = 'u32[144,128]{1,0:T(1,128)}', space=vmem, size = 0x12000, scoped, tag = 'internal scratch']
  #allocation2 [shape = 'f32[216,128]{1,0:T(8,128)}', space=vmem, size = 0x1b000, scoped, tag = 'scratch operand']
  %s0 = inlined_call_operand.vmem [shape: bf16[2,10,256,12], index: 0, kind: input, shape index: {}]
  %s1 = inlined_call_operand.hbm [shape: bf16[9,12,128], index: 1, kind: input, shape index: {}]
  %s2 = inlined_call_operand.hbm [shape: f32[1,128], index: 2, kind: input, shape index: {}]
  %s3 = inlined_call_operand.hbm [shape: f32[1,128], index: 3, kind: input, shape index: {}]
  %s4 = inlined_call_operand.hbm [shape: f32[2,8,216,128], index: 4, kind: output, shape index: {}]
  %s5 = sld [smem:[#allocation0]]
  $region73: #{tpu_custom_call.1} parent=0
    _
  %s7 = ssub.s32 1, %s5
  %s8 = scalar_select 0, %s7, %s5
  $region1: #{tpu_custom_call.1} parent=0
    #allocation3 [shape = 'u8[36864]{0}', space=vmem, size = 0x9000, scoped, tag = 'input window, operand 1, single buffered']
    #allocation4 [shape = 's32[2]{0}', space=sflag, size = 0x8, scoped, tag = 'scoped memory for tpu_custom_call.1']
    #allocation5 [shape = 's32[2]{0}', space=sflag, size = 0x8, scoped, tag = 'scoped memory for tpu_custom_call.1']
    #allocation6 [shape = 'u8[512]{0}', space=vmem, size = 0x400, scoped, tag = 'input window, operand 2, single buffered']
    #allocation7 [shape = 's32[1]{0}', space=sflag, size = 0x4, scoped, tag = 'scoped memory for tpu_custom_call.1']
    #allocation8 [shape = 'u8[512]{0}', space=vmem, size = 0x400, scoped, tag = 'input window, operand 3, single buffered']
    #allocation9 [shape = 'u8[221184]{0}', space=vmem, size = 0x36000, scoped, tag = 'output window, operand 0']
    %9 = vsyncpa [#allocation4], 0
    %10 = vsyncpa [#allocation7], 0
    %11 = vsyncpa [#allocation5], 0
    %s12 = scalar_lea.sflag [#allocation5], 1
    %13 = vsyncpa %s12, 0
    loop: start=0, step=1, limit=50
    $region2: #{tpu_custom_call.1} parent=1 // loop_pre_header
      _
    $region3: #{tpu_custom_call.1} parent=1 // loop_header
      %s15 = sphi 0, %s19
      %p16 = scmp.ge.s32.totalorder %s15, 50
      %s22 = sphi 0, %s41
      %s23 = sphi 0, %s37
      %s24 = sphi 0, %s33
      %s25 = sphi 0, %s22
      %s26 = sphi 0, %s23
      %s27 = sphi 0, %s24
      %s28 = sphi 0, %s25
      %s29 = sphi 0, %s26
      %s30 = sphi 0, %s27
      %s48 = sphi 0, %s50
      %s51 = sphi 0, %s48
      %s52 = sphi 0, %s51
      %s68 = sphi 0, %s52
      %s72 = sphi 0, %s72
      %s74 = sphi 0, %s72
      %s75 = sphi 0, %s74
      %s89 = sphi 0, %s75
      %s93 = sphi 0, %s93
      %s95 = sphi 0, %s93
      %s96 = sphi 0, %s95
      %s110 = sphi 0, %s96
      %s114 = sphi 0, %s114
      %s116 = sphi 0, %s114
      %s117 = sphi 0, %s116
      %s131 = sphi 0, %s117
      %s139 = sphi 0, %s141
      %s142 = sphi 0, %s139
      %s143 = sphi 0, %s142
      %s159 = sphi 0, %s143
    $region4: #{tpu_custom_call.1} parent=1 // loop_header_branch
      %18 = sbr.rel (%p16) target = $region8
    $region5: #{tpu_custom_call.1} parent=1 // loop_body
      %s20 = ssub.s32 %s15, 1
      %s21 = ssub.s32 %s15, 2
      %s31 = sadd.s32 1, %s24
      %p32 = scmp.ge.s32.totalorder %s31, 3
      %s33 = scalar_select %p32, 0, %s31
      %s34 = sadd.s32 1, %s23
      %s35 = scalar_select %p32, %s34, %s23
      %p36 = scmp.ge.s32.totalorder %s35, 8
      %s37 = scalar_select %p36, 0, %s35
      %s38 = sadd.s32 1, %s22
      %s39 = scalar_select %p36, %s38, %s22
      %p40 = scmp.ge.s32.totalorder %s39, 2
      %s41 = scalar_select %p40, 0, %s39
      %s42 = sadd.s32 %s23, %s24
      %s43 = sadd.s32 %s37, %s33
      %s44 = ssub.s32 %s22, %s41
      %s45 = ssub.s32 %s42, %s43
      %s46 = sor.u32 %s44, %s45
      %p47 = scmp.eq.s32.totalorder %s46, 0
      %s49 = sadd.s32 %s48, 1
      %s50 = scalar_select %p47, %s48, %s49
      %p53 = pneg %p47
      %p54 = scmp.eq.s32.totalorder %s15, 47
      %p55 = por %p53, %p54
      %p56 = scmp.ne.s32.totalorder %s48, %s51
      %p57 = scmp.eq.s32.totalorder %s15, 0
      %p58 = por %p56, %p57
      %p59 = scmp.ne.s32.totalorder %s48, %s51
      %p60 = scmp.eq.s32.totalorder %s20, 47
      %p61 = por %p59, %p60
      %p62 = scmp.ne.s32.totalorder %s51, %s52
      %p63 = scmp.eq.s32.totalorder %s20, 0
      %p64 = por %p62, %p63
      %p65 = scmp.ne.s32.totalorder %s51, %s52
      %p66 = scmp.eq.s32.totalorder %s21, 47
      %p67 = por %p65, %p66
      %p69 = scmp.ne.s32.totalorder %s52, %s68
      %p70 = scmp.eq.s32.totalorder %s21, 0
      %p71 = por %p69, %p70
      %s73 = sadd.s32 %s72, 1
      %p76 = scmp.eq.s32.totalorder %s15, 47
      %p77 = scmp.ne.s32.totalorder %s72, %s74
      %p78 = scmp.eq.s32.totalorder %s15, 0
      %p79 = por %p77, %p78
      %p80 = scmp.ne.s32.totalorder %s72, %s74
      %p81 = scmp.eq.s32.totalorder %s20, 47
      %p82 = por %p80, %p81
      %p83 = scmp.ne.s32.totalorder %s74, %s75
      %p84 = scmp.eq.s32.totalorder %s20, 0
      %p85 = por %p83, %p84
      %p86 = scmp.ne.s32.totalorder %s74, %s75
      %p87 = scmp.eq.s32.totalorder %s21, 47
      %p88 = por %p86, %p87
      %p90 = scmp.ne.s32.totalorder %s75, %s89
      %p91 = scmp.eq.s32.totalorder %s21, 0
      %p92 = por %p90, %p91
      %s94 = sadd.s32 %s93, 1
      %p97 = scmp.eq.s32.totalorder %s15, 47
      %p98 = scmp.ne.s32.totalorder %s93, %s95
      %p99 = scmp.eq.s32.totalorder %s15, 0
      %p100 = por %p98, %p99
      %p101 = scmp.ne.s32.totalorder %s93, %s95
      %p102 = scmp.eq.s32.totalorder %s20, 47
      %p103 = por %p101, %p102
      %p104 = scmp.ne.s32.totalorder %s95, %s96
      %p105 = scmp.eq.s32.totalorder %s20, 0
      %p106 = por %p104, %p105
      %p107 = scmp.ne.s32.totalorder %s95, %s96
      %p108 = scmp.eq.s32.totalorder %s21, 47
      %p109 = por %p107, %p108
      %p111 = scmp.ne.s32.totalorder %s96, %s110
      %p112 = scmp.eq.s32.totalorder %s21, 0
      %p113 = por %p111, %p112
      %s115 = sadd.s32 %s114, 1
      %p118 = scmp.eq.s32.totalorder %s15, 47
      %p119 = scmp.ne.s32.totalorder %s114, %s116
      %p120 = scmp.eq.s32.totalorder %s15, 0
      %p121 = por %p119, %p120
      %p122 = scmp.ne.s32.totalorder %s114, %s116
      %p123 = scmp.eq.s32.totalorder %s20, 47
      %p124 = por %p122, %p123
      %p125 = scmp.ne.s32.totalorder %s116, %s117
      %p126 = scmp.eq.s32.totalorder %s20, 0
      %p127 = por %p125, %p126
      %p128 = scmp.ne.s32.totalorder %s116, %s117
      %p129 = scmp.eq.s32.totalorder %s21, 47
      %p130 = por %p128, %p129
      %p132 = scmp.ne.s32.totalorder %s117, %s131
      %p133 = scmp.eq.s32.totalorder %s21, 0
      %p134 = por %p132, %p133
      %s135 = ssub.s32 %s22, %s41
      %s136 = ssub.s32 %s23, %s37
      %s137 = sor.u32 %s135, %s136
      %p138 = scmp.eq.s32.totalorder %s137, 0
      %s140 = sadd.s32 %s139, 1
      %s141 = scalar_select %p138, %s139, %s140
      %p144 = pneg %p138
      %p145 = scmp.eq.s32.totalorder %s15, 47
      %p146 = por %p144, %p145
      %p147 = scmp.ne.s32.totalorder %s139, %s142
      %p148 = scmp.eq.s32.totalorder %s15, 0
      %p149 = por %p147, %p148
      %p150 = scmp.ne.s32.totalorder %s139, %s142
      %p151 = scmp.eq.s32.totalorder %s20, 47
      %p152 = por %p150, %p151
      %p153 = scmp.ne.s32.totalorder %s142, %s143
      %p154 = scmp.eq.s32.totalorder %s20, 0
      %p155 = por %p153, %p154
      %p156 = scmp.ne.s32.totalorder %s142, %s143
      %p157 = scmp.eq.s32.totalorder %s21, 47
      %p158 = por %p156, %p157
      %p160 = scmp.ne.s32.totalorder %s143, %s159
      %p161 = scmp.eq.s32.totalorder %s21, 0
      %p162 = por %p160, %p161
      %p163 = scmp.le.s32.totalorder 1, %s15
      %p164 = scmp.lt.s32.totalorder %s15, 49
      %p165 = pnand %p163, %p164
      %p166 = pneg %p165
      // Predicated region
      $region9: #{tpu_custom_call.1} parent=5 // pred_check
        _
      $region10: #{tpu_custom_call.1} parent=5 // pred_check_branch
        %168 = sbr.rel (%p165) target = $region12
      $region11: #{tpu_custom_call.1} parent=5 // pred_region
        %s169 = ssub.s32 %s15, 1
        // Predicated region
        $region13: #{tpu_custom_call.1} parent=11 // pred_check
          %p170 = pneg %p85
        $region14: #{tpu_custom_call.1} parent=11 // pred_check_branch
          %172 = sbr.rel (%p170) target = $region16
        $region15: #{tpu_custom_call.1} parent=11 // pred_region
          %s174 = ssub.s32 1152, 1152
          %175 = vsyncadd [#allocation4], %s174
          %s176 = sshll.u32 [#allocation3], 4
          %s177 = int_to_ptr.vmem [resolvable:$true] %s176
          %182 = dma.hbm_to_vmem [thread:$0]  %s1, 1152, %s177, [#allocation4], 64, 64, 4
        $region16: #{tpu_custom_call.1} parent=11 // pred_fallthru
          _
        // Predicated region
        $region17: #{tpu_custom_call.1} parent=11 // pred_check
          %p183 = pneg %p106
        $region18: #{tpu_custom_call.1} parent=11 // pred_check_branch
          %185 = sbr.rel (%p183) target = $region20
        $region19: #{tpu_custom_call.1} parent=11 // pred_region
          %s187 = ssub.s32 16, 16
          %188 = vsyncadd [#allocation7], %s187
          %s190 = sshll.u32 [#allocation6], 4
          %s191 = int_to_ptr.vmem [resolvable:$true] %s190
          %193 = dma.hbm_to_vmem [thread:$0]  %s2, 16, %s191, [#allocation7]
        $region20: #{tpu_custom_call.1} parent=11 // pred_fallthru
          _
        // Predicated region
        $region21: #{tpu_custom_call.1} parent=11 // pred_check
          %p194 = pneg %p127
        $region22: #{tpu_custom_call.1} parent=11 // pred_check_branch
          %196 = sbr.rel (%p194) target = $region24
        $region23: #{tpu_custom_call.1} parent=11 // pred_region
          %s198 = ssub.s32 16, 16
          %199 = vsyncadd [#allocation7], %s198
          %s201 = sshll.u32 [#allocation8], 4
          %s202 = int_to_ptr.vmem [resolvable:$true] %s201
          %204 = dma.hbm_to_vmem [thread:$0]  %s3, 16, %s202, [#allocation7]
        $region24: #{tpu_custom_call.1} parent=11 // pred_fallthru
          _
      $region12: #{tpu_custom_call.1} parent=5 // pred_fallthru
        _
      %p205 = scmp.lt.s32.totalorder %s15, 48
      // Predicated region
      $region25: #{tpu_custom_call.1} parent=5 // pred_check
        %p206 = pneg %p205
      $region26: #{tpu_custom_call.1} parent=5 // pred_check_branch
        %208 = sbr.rel (%p206) target = $region28
      $region27: #{tpu_custom_call.1} parent=5 // pred_region
        // Predicated region
        $region29: #{tpu_custom_call.1} parent=27 // pred_check
          %p209 = pneg %p58
        $region30: #{tpu_custom_call.1} parent=27 // pred_check_branch
          %211 = sbr.rel (%p209) target = $region32
        $region31: #{tpu_custom_call.1} parent=27 // pred_region
          %s212 = sadd.s32 %s23, %s24
          %p213 = scmp.lt.s32.totalorder %s22, 1
          %s214 = scalar_select %p213, %s22, 1
          %p215 = scmp.lt.s32.totalorder %s212, 9
          %s216 = scalar_select %p215, %s212, 9
          %s217 = smul.addr %s216, 32
          %s218 = smul.addr %s214, 320
          %s219 = sadd.s32 %s217, %s218
          %s220 = smul.addr %s219, 4
          %s221 = scalar_lea.vmem %s0, %s220
          %s222 = sadd.s32 %s23, %s24
        $region32: #{tpu_custom_call.1} parent=27 // pred_fallthru
          _
      $region28: #{tpu_custom_call.1} parent=5 // pred_fallthru
        _
      %p223 = scmp.le.s32.totalorder 1, %s15
      %p224 = scmp.lt.s32.totalorder %s15, 49
      %p225 = pnand %p223, %p224
      %p226 = pneg %p225
      // Predicated region
      $region33: #{tpu_custom_call.1} parent=5 // pred_check
        _
      $region34: #{tpu_custom_call.1} parent=5 // pred_check_branch
        %228 = sbr.rel (%p225) target = $region36
      $region35: #{tpu_custom_call.1} parent=5 // pred_region
        %s229 = ssub.s32 %s15, 1
        // Predicated region
        $region37: #{tpu_custom_call.1} parent=35 // pred_check
          %p230 = pneg %p85
        $region38: #{tpu_custom_call.1} parent=35 // pred_check_branch
          %232 = sbr.rel (%p230) target = $region40
        $region39: #{tpu_custom_call.1} parent=35 // pred_region
          %233 = dma.done [#allocation4], 1152
        $region40: #{tpu_custom_call.1} parent=35 // pred_fallthru
          _
        // Predicated region
        $region41: #{tpu_custom_call.1} parent=35 // pred_check
          %p234 = pneg %p106
        $region42: #{tpu_custom_call.1} parent=35 // pred_check_branch
          %236 = sbr.rel (%p234) target = $region44
        $region43: #{tpu_custom_call.1} parent=35 // pred_region
          %237 = dma.done [#allocation7], 16
        $region44: #{tpu_custom_call.1} parent=35 // pred_fallthru
          _
        // Predicated region
        $region45: #{tpu_custom_call.1} parent=35 // pred_check
          %p238 = pneg %p127
        $region46: #{tpu_custom_call.1} parent=35 // pred_check_branch
          %240 = sbr.rel (%p238) target = $region48
        $region47: #{tpu_custom_call.1} parent=35 // pred_region
          %241 = dma.done [#allocation7], 16
        $region48: #{tpu_custom_call.1} parent=35 // pred_fallthru
          _
        %s242 = sadd.s32 %s26, %s27
        %p243 = scmp.lt.s32.totalorder %s25, 1
        %s244 = scalar_select %p243, %s25, 1
        %p245 = scmp.lt.s32.totalorder %s242, 9
        %s246 = scalar_select %p245, %s242, 9
        %s247 = smul.addr %s246, 32
        %s248 = smul.addr %s244, 320
        %s249 = sadd.s32 %s247, %s248
        %s250 = smul.addr %s249, 4
        %s251 = scalar_lea.vmem %s0, %s250
        %p252 = pneg %p64
        %p253 = pneg %p61
        %p254 = pneg %p85
        %p255 = pneg %p82
        %p256 = pneg %p106
        %p257 = pneg %p103
        %p258 = pneg %p127
        %p259 = pneg %p124
        %p260 = pneg %p155
        %p261 = pneg %p152
        %s262 = sand.u32 %s142, 1
        %s263 = scalar_lea.sflag [#allocation5], %s262
        %s264 = sand.u32 %s142, 1
        %s265 = smul.addr %s264, 216
        %s266 = scalar_lea.vmem [#allocation9], %s265
        %s267 = sadd.s32 %s26, %s27
        %p268 = scmp.lt.s32.totalorder %s25, 1
        %s269 = scalar_select %p268, %s25, 1
        %p270 = scmp.lt.s32.totalorder %s267, 9
        %s271 = scalar_select %p270, %s267, 9
        %s272 = smul.addr %s271, 32
        %s273 = smul.addr %s269, 320
        %s274 = sadd.s32 %s272, %s273
        %s275 = smul.addr %s274, 4
        %s276 = scalar_lea.vmem %s0, %s275
        %s277 = sadd.s32 %s26, %s27
        %v279 = vld [vmem:[%s276] sm:$0xf]
        %v280 = vld [vmem:[%s276 + $0x4] sm:$0xf]
        %v281 = vld [vmem:[%s276 + $0x8] sm:$0xf]
        %v282 = vld [vmem:[%s276 + $0xc] sm:$0xf]
        %v283 = vld [vmem:[%s276 + $0x10] sm:$0xf]
        %v284 = vld [vmem:[%s276 + $0x14] sm:$0xf]
        %v285 = vld [vmem:[%s276 + $0x18] sm:$0xf]
        %v286 = vld [vmem:[%s276 + $0x1c] sm:$0xf]
        %v287 = vld [vmem:[%s276 + $0x20] sm:$0xf]
        %v288 = vld [vmem:[%s276 + $0x24] sm:$0xf]
        %v289 = vld [vmem:[%s276 + $0x28] sm:$0xf]
        %v290 = vld [vmem:[%s276 + $0x2c] sm:$0xf]
        %v291 = vld [vmem:[%s276 + $0x30] sm:$0xf]
        %v292 = vld [vmem:[%s276 + $0x34] sm:$0xf]
        %v293 = vld [vmem:[%s276 + $0x38] sm:$0xf]
        %v294 = vld [vmem:[%s276 + $0x3c] sm:$0xf]
        %v295 = vld [vmem:[%s276 + $0x40] sm:$0xf]
        %v296 = vld [vmem:[%s276 + $0x44] sm:$0xf]
        %v297 = vld [vmem:[%s276 + $0x48] sm:$0xf]
        %v298 = vld [vmem:[%s276 + $0x4c] sm:$0xf]
        %v299 = vld [vmem:[%s276 + $0x50] sm:$0xf]
        %v300 = vld [vmem:[%s276 + $0x54] sm:$0xf]
        %v301 = vld [vmem:[%s276 + $0x58] sm:$0xf]
        %v302 = vld [vmem:[%s276 + $0x5c] sm:$0xf]
        %v303 = vld [vmem:[%s276 + $0x60] sm:$0xf]
        %v304 = vld [vmem:[%s276 + $0x64] sm:$0xf]
        %v305 = vld [vmem:[%s276 + $0x68] sm:$0xf]
        %s306 = smul.u32 %s27, 3
        %s307 = smul.u32 %s306, 2
        %s308 = smul.addr %s307, 4
        %s309 = scalar_lea.vmem [#allocation3], %s308
        %v310 = vld [vmem:[%s309] sm:$0xf]
        %v311 = vld [vmem:[%s309 + $0x4] sm:$0x3]
        %v312 = vld [vmem:[%s276 + $0x8] sm:$0xe]
        %v313 = vld [vmem:[%s276 + $0x6c] sm:$0xf]
        %v314 = vld [vmem:[%s276 + $0x70] sm:$0xf]
        %v315 = vld [vmem:[%s276 + $0x74] sm:$0x1]
        %s316 = sadd.s32 %s306, 1
        %s317 = smul.u32 %s316, 2
        %s318 = smul.addr %s317, 4
        %s319 = scalar_lea.vmem [#allocation3], %s318
        %v320 = vld [vmem:[%s319] sm:$0xf]
        %v321 = vld [vmem:[%s319 + $0x4] sm:$0x3]
        %v350 = vunpack.c.l.b16 %v312
        %v351 = vunpack.c.l.b16 %v282
        %v352 = vunpack.c.l.b16 %v283
        %v353 = vunpack.c.l.b16 %v284
        %v354 = vunpack.c.l.b16 %v285
        %v355 = vunpack.c.l.b16 %v286
        %v356 = vunpack.c.l.b16 %v287
        %v357 = vunpack.c.l.b16 %v288
        %v358 = vunpack.c.l.b16 %v289
        %v359 = vunpack.c.l.b16 %v290
        %v360 = vunpack.c.l.b16 %v291
        %v361 = vunpack.c.l.b16 %v292
        %v362 = vunpack.c.l.b16 %v293
        %v363 = vunpack.c.l.b16 %v294
        %v364 = vunpack.c.l.b16 %v295
        %v365 = vunpack.c.l.b16 %v296
        %v366 = vunpack.c.l.b16 %v297
        %v367 = vunpack.c.l.b16 %v298
        %v368 = vunpack.c.l.b16 %v299
        %v369 = vunpack.c.l.b16 %v300
        %v370 = vunpack.c.l.b16 %v301
        %v371 = vunpack.c.l.b16 %v302
        %v372 = vunpack.c.l.b16 %v303
        %v373 = vunpack.c.l.b16 %v304
        %v374 = vunpack.c.l.b16 %v305
        %v375 = vunpack.c.l.b16 %v313
        %v376 = vunpack.c.l.b16 %v314
        %v377 = vunpack.c.l.b16 %v315
        %v378 = vpack.c.b16 %v351, %v350
        %v379 = vpack.c.b16 %v353, %v352
        %v380 = vpack.c.b16 %v355, %v354
        %v381 = vpack.c.b16 %v357, %v356
        %v382 = vpack.c.b16 %v359, %v358
        %v383 = vpack.c.b16 %v361, %v360
        %v384 = vpack.c.b16 %v363, %v362
        %v385 = vpack.c.b16 %v365, %v364
        %v386 = vpack.c.b16 %v367, %v366
        %v387 = vpack.c.b16 %v369, %v368
        %v388 = vpack.c.b16 %v371, %v370
        %v389 = vpack.c.b16 %v373, %v372
        %v390 = vpack.c.b16 %v375, %v374
        %v391 = vpack.c.b16 %v377, %v376
        %vm392 = vcmask 1046528
        %v393 = vrot.slane %v378, 1
        %v394 = vrot.slane %v379, 1
        %v395 = vsel %vm392, %v393, %v394
        %v396 = vrot.slane %v380, 1
        %v397 = vsel %vm392, %v394, %v396
        %v398 = vrot.slane %v381, 1
        %v399 = vsel %vm392, %v396, %v398
        %v400 = vrot.slane %v382, 1
        %v401 = vsel %vm392, %v398, %v400
        %v402 = vrot.slane %v383, 1
        %v403 = vsel %vm392, %v400, %v402
        %v404 = vrot.slane %v384, 1
        %v405 = vsel %vm392, %v402, %v404
        %v406 = vrot.slane %v385, 1
        %v407 = vsel %vm392, %v404, %v406
        %v408 = vrot.slane %v386, 1
        %v409 = vsel %vm392, %v406, %v408
        %v410 = vrot.slane %v387, 1
        %v411 = vsel %vm392, %v408, %v410
        %v412 = vrot.slane %v388, 1
        %v413 = vsel %vm392, %v410, %v412
        %v414 = vrot.slane %v389, 1
        %v415 = vsel %vm392, %v412, %v414
        %v416 = vrot.slane %v390, 1
        %v417 = vsel %vm392, %v414, %v416
        %v418 = vrot.slane %v391, 1
        %v419 = vsel %vm392, %v416, %v418
        %v422 = vunpack.c.l.b16 %v320
        %v423 = vunpack.c.l.b16 %v321
        %v424 = vpack.c.b16 %v423, %v422
        %vm425 = vcmask 97280
        %v427 = vsel %vm425, %v395, 0
        %v430 = vsel %vm425, %v397, 0
        %v433 = vsel %vm425, %v399, 0
        %v436 = vsel %vm425, %v401, 0
        %v439 = vsel %vm425, %v403, 0
        %v442 = vsel %vm425, %v405, 0
        %v445 = vsel %vm425, %v407, 0
        %v448 = vsel %vm425, %v409, 0
        %v451 = vsel %vm425, %v411, 0
        %v454 = vsel %vm425, %v413, 0
        %v457 = vsel %vm425, %v415, 0
        %v460 = vsel %vm425, %v417, 0
        %v463 = vsel %vm425, %v419, 0
        %v466 = vsel %vm425, %v418, 0
        %vm468 = vcmask 1045504
        %v470 = vsel %vm468, %v424, 0
        %472 = vmatprep.subr.bf16.mxu0 0
        %473 = vmatpush1.bf16.msra.mxu0 0
        %474 = vmatprep.subr.bf16.mxu0 0
        %475 = vmatpush1.bf16.msra.mxu0 0
        %476 = vmatprep.subr.bf16.mxu0 0
        %477 = vmatpush1.bf16.msra.mxu0 0
        %478 = vmatprep.subr.bf16.mxu0 0
        %479 = vmatpush1.bf16.msra.mxu0 0
        %480 = vmatprep.subr.bf16.mxu0 0
        %481 = vmatpush1.bf16.msra.mxu0 0
        %482 = vmatprep.subr.bf16.mxu0 0
        %483 = vmatpush1.bf16.msra.mxu0 0
        %484 = vmatprep.subr.bf16.mxu0 0
        %485 = vmatpush1.bf16.msra.mxu0 0
        %486 = vmatprep.subr.bf16.mxu0 0
        %487 = vmatpush1.bf16.msra.mxu0 %v470
        %488 = vmatprep.subr.bf16.mxu0 0
        %489 = vmatpush2.bf16.msra.mxu0 0
        %490 = vmatprep.subr.bf16.mxu0 0
        %491 = vmatpush2.bf16.msra.mxu0 0
        %492 = vmatprep.subr.bf16.mxu0 0
        %493 = vmatpush2.bf16.msra.mxu0 0
        %494 = vmatprep.subr.bf16.mxu0 0
        %495 = vmatpush2.bf16.msra.mxu0 0
        %496 = vmatprep.subr.bf16.mxu0 0
        %497 = vmatpush2.bf16.msra.mxu0 0
        %498 = vmatprep.subr.bf16.mxu0 0
        %499 = vmatpush2.bf16.msra.mxu0 0
        %500 = vmatprep.subr.bf16.mxu0 0
        %501 = vmatpush2.bf16.msra.mxu0 0
        %502 = vmatprep.subr.bf16.mxu0 0
        %503 = vmatpush2.bf16.msra.mxu0 0
        %504 = vmatprep.mubr.bf16.mxu0 0
        %505 = vmatmul.mubr.bf16.gmra.mxu0 %v427
        %v506 = vpop.f32.mrf.mxu0
        %v507 = vadd.f32 0.0, %v506
        %v508 = vpop.f32.mrf.mxu0
        %v509 = vpop.f32.mrf.mxu0
        %v510 = vadd.f32 0.0, %v509
        %v511 = vpop.f32.mrf.mxu0
        %512 = vmatprep.mubr.bf16.mxu0 0
        %513 = vmatmul.mubr.bf16.gmra.mxu0 %v430
        %v514 = vpop.f32.mrf.mxu0
        %v515 = vadd.f32 0.0, %v514
        %v516 = vpop.f32.mrf.mxu0
        %v517 = vpop.f32.mrf.mxu0
        %v518 = vadd.f32 0.0, %v517
        %v519 = vpop.f32.mrf.mxu0
        %520 = vmatprep.mubr.bf16.mxu0 0
        %521 = vmatmul.mubr.bf16.gmra.mxu0 %v433
        %v522 = vpop.f32.mrf.mxu0
        %v523 = vadd.f32 0.0, %v522
        %v524 = vpop.f32.mrf.mxu0
        %v525 = vpop.f32.mrf.mxu0
        %v526 = vadd.f32 0.0, %v525
        %v527 = vpop.f32.mrf.mxu0
        %528 = vmatprep.mubr.bf16.mxu0 0
        %529 = vmatmul.mubr.bf16.gmra.mxu0 %v436
        %v530 = vpop.f32.mrf.mxu0
        %v531 = vadd.f32 0.0, %v530
        %v532 = vpop.f32.mrf.mxu0
        %v533 = vpop.f32.mrf.mxu0
        %v534 = vadd.f32 0.0, %v533
        %v535 = vpop.f32.mrf.mxu0
        %536 = vmatprep.mubr.bf16.mxu0 0
        %537 = vmatmul.mubr.bf16.gmra.mxu0 %v439
        %v538 = vpop.f32.mrf.mxu0
        %v539 = vadd.f32 0.0, %v538
        %v540 = vpop.f32.mrf.mxu0
        %v541 = vpop.f32.mrf.mxu0
        %v542 = vadd.f32 0.0, %v541
        %v543 = vpop.f32.mrf.mxu0
        %544 = vmatprep.mubr.bf16.mxu0 0
        %545 = vmatmul.mubr.bf16.gmra.mxu0 %v442
        %v546 = vpop.f32.mrf.mxu0
        %v547 = vadd.f32 0.0, %v546
        %v548 = vpop.f32.mrf.mxu0
        %v549 = vpop.f32.mrf.mxu0
        %v550 = vadd.f32 0.0, %v549
        %v551 = vpop.f32.mrf.mxu0
        %552 = vmatprep.mubr.bf16.mxu0 0
        %553 = vmatmul.mubr.bf16.gmra.mxu0 %v445
        %v554 = vpop.f32.mrf.mxu0
        %v555 = vadd.f32 0.0, %v554
        %v556 = vpop.f32.mrf.mxu0
        %v557 = vpop.f32.mrf.mxu0
        %v558 = vadd.f32 0.0, %v557
        %v559 = vpop.f32.mrf.mxu0
        %560 = vmatprep.mubr.bf16.mxu0 0
        %561 = vmatmul.mubr.bf16.gmra.mxu0 %v448
        %v562 = vpop.f32.mrf.mxu0
        %v563 = vadd.f32 0.0, %v562
        %v564 = vpop.f32.mrf.mxu0
        %v565 = vpop.f32.mrf.mxu0
        %v566 = vadd.f32 0.0, %v565
        %v567 = vpop.f32.mrf.mxu0
        %568 = vmatprep.mubr.bf16.mxu0 0
        %569 = vmatmul.mubr.bf16.gmra.mxu0 %v451
        %v570 = vpop.f32.mrf.mxu0
        %v571 = vadd.f32 0.0, %v570
        %v572 = vpop.f32.mrf.mxu0
        %v573 = vpop.f32.mrf.mxu0
        %v574 = vadd.f32 0.0, %v573
        %v575 = vpop.f32.mrf.mxu0
        %576 = vmatprep.mubr.bf16.mxu0 0
        %577 = vmatmul.mubr.bf16.gmra.mxu0 %v454
        %v578 = vpop.f32.mrf.mxu0
        %v579 = vadd.f32 0.0, %v578
        %v580 = vpop.f32.mrf.mxu0
        %v581 = vpop.f32.mrf.mxu0
        %v582 = vadd.f32 0.0, %v581
        %v583 = vpop.f32.mrf.mxu0
        %584 = vmatprep.mubr.bf16.mxu0 0
        %585 = vmatmul.mubr.bf16.gmra.mxu0 %v457
        %v586 = vpop.f32.mrf.mxu0
        %v587 = vadd.f32 0.0, %v586
        %v588 = vpop.f32.mrf.mxu0
        %v589 = vpop.f32.mrf.mxu0
        %v590 = vadd.f32 0.0, %v589
        %v591 = vpop.f32.mrf.mxu0
        %592 = vmatprep.mubr.bf16.mxu0 0
        %593 = vmatmul.mubr.bf16.gmra.mxu0 %v460
        %v594 = vpop.f32.mrf.mxu0
        %v595 = vadd.f32 0.0, %v594
        %v596 = vpop.f32.mrf.mxu0
        %v597 = vpop.f32.mrf.mxu0
        %v598 = vadd.f32 0.0, %v597
        %v599 = vpop.f32.mrf.mxu0
        %600 = vmatprep.mubr.bf16.mxu0 0
        %601 = vmatmul.mubr.bf16.gmra.mxu0 %v463
        %v602 = vpop.f32.mrf.mxu0
        %v603 = vadd.f32 0.0, %v602
        %v604 = vpop.f32.mrf.mxu0
        %v605 = vpop.f32.mrf.mxu0
        %v606 = vadd.f32 0.0, %v605
        %v607 = vpop.f32.mrf.mxu0
        %608 = vmatprep.mubr.bf16.mxu0 0
        %609 = vmatmul.mubr.bf16.gmra.mxu0 %v466
        %v610 = vpop.f32.mrf.mxu0
        %v611 = vadd.f32 0.0, %v610
        %v612 = vpop.f32.mrf.mxu0
        %v613 = vpop.f32.mrf.mxu0
        %v614 = vpop.f32.mrf.mxu0
        %615 = vdwg.mxu0
        %v619 = vunpack.c.l.b16 %v279
        %v620 = vunpack.c.l.b16 %v280
        %v621 = vunpack.c.l.b16 %v281
        %v622 = vpack.c.b16 %v620, %v619
        %v623 = vpack.c.b16 %v351, %v621
        %v624 = vpack.c.b16 %v374, %v374
        %v627 = vunpack.c.l.b16 %v310
        %v628 = vunpack.c.l.b16 %v311
        %v629 = vpack.c.b16 %v628, %v627
        %v631 = vsel %vm425, %v622, 0
        %v634 = vsel %vm425, %v623, 0
        %v637 = vsel %vm425, %v379, 0
        %v640 = vsel %vm425, %v380, 0
        %v643 = vsel %vm425, %v381, 0
        %v646 = vsel %vm425, %v382, 0
        %v649 = vsel %vm425, %v383, 0
        %v652 = vsel %vm425, %v384, 0
        %v655 = vsel %vm425, %v385, 0
        %v658 = vsel %vm425, %v386, 0
        %v661 = vsel %vm425, %v387, 0
        %v664 = vsel %vm425, %v388, 0
        %v667 = vsel %vm425, %v389, 0
        %v670 = vsel %vm425, %v624, 0
        %v673 = vsel %vm468, %v629, 0
        %675 = vmatprep.subr.bf16.mxu0 0
        %676 = vmatpush1.bf16.msra.mxu0 0
        %677 = vmatprep.subr.bf16.mxu0 0
        %678 = vmatpush1.bf16.msra.mxu0 0
        %679 = vmatprep.subr.bf16.mxu0 0
        %680 = vmatpush1.bf16.msra.mxu0 0
        %681 = vmatprep.subr.bf16.mxu0 0
        %682 = vmatpush1.bf16.msra.mxu0 0
        %683 = vmatprep.subr.bf16.mxu0 0
        %684 = vmatpush1.bf16.msra.mxu0 0
        %685 = vmatprep.subr.bf16.mxu0 0
        %686 = vmatpush1.bf16.msra.mxu0 0
        %687 = vmatprep.subr.bf16.mxu0 0
        %688 = vmatpush1.bf16.msra.mxu0 0
        %689 = vmatprep.subr.bf16.mxu0 0
        %690 = vmatpush1.bf16.msra.mxu0 %v673
        %691 = vmatprep.subr.bf16.mxu0 0
        %692 = vmatpush2.bf16.msra.mxu0 0
        %693 = vmatprep.subr.bf16.mxu0 0
        %694 = vmatpush2.bf16.msra.mxu0 0
        %695 = vmatprep.subr.bf16.mxu0 0
        %696 = vmatpush2.bf16.msra.mxu0 0
        %697 = vmatprep.subr.bf16.mxu0 0
        %698 = vmatpush2.bf16.msra.mxu0 0
        %699 = vmatprep.subr.bf16.mxu0 0
        %700 = vmatpush2.bf16.msra.mxu0 0
        %701 = vmatprep.subr.bf16.mxu0 0
        %702 = vmatpush2.bf16.msra.mxu0 0
        %703 = vmatprep.subr.bf16.mxu0 0
        %704 = vmatpush2.bf16.msra.mxu0 0
        %705 = vmatprep.subr.bf16.mxu0 0
        %706 = vmatpush2.bf16.msra.mxu0 0
        %707 = vmatprep.mubr.bf16.mxu0 0
        %708 = vmatmul.mubr.bf16.gmra.mxu0 %v631
        %v709 = vpop.f32.mrf.mxu0
        %v710 = vadd.f32 %v507, %v709
        %v711 = vpop.f32.mrf.mxu0
        %v712 = vpop.f32.mrf.mxu0
        %v713 = vadd.f32 %v510, %v712
        %v714 = vpop.f32.mrf.mxu0
        %715 = vmatprep.mubr.bf16.mxu0 0
        %716 = vmatmul.mubr.bf16.gmra.mxu0 %v634
        %v717 = vpop.f32.mrf.mxu0
        %v718 = vadd.f32 %v515, %v717
        %v719 = vpop.f32.mrf.mxu0
        %v720 = vpop.f32.mrf.mxu0
        %v721 = vadd.f32 %v518, %v720
        %v722 = vpop.f32.mrf.mxu0
        %723 = vmatprep.mubr.bf16.mxu0 0
        %724 = vmatmul.mubr.bf16.gmra.mxu0 %v637
        %v725 = vpop.f32.mrf.mxu0
        %v726 = vadd.f32 %v523, %v725
        %v727 = vpop.f32.mrf.mxu0
        %v728 = vpop.f32.mrf.mxu0
        %v729 = vadd.f32 %v526, %v728
        %v730 = vpop.f32.mrf.mxu0
        %731 = vmatprep.mubr.bf16.mxu0 0
        %732 = vmatmul.mubr.bf16.gmra.mxu0 %v640
        %v733 = vpop.f32.mrf.mxu0
        %v734 = vadd.f32 %v531, %v733
        %v735 = vpop.f32.mrf.mxu0
        %v736 = vpop.f32.mrf.mxu0
        %v737 = vadd.f32 %v534, %v736
        %v738 = vpop.f32.mrf.mxu0
        %739 = vmatprep.mubr.bf16.mxu0 0
        %740 = vmatmul.mubr.bf16.gmra.mxu0 %v643
        %v741 = vpop.f32.mrf.mxu0
        %v742 = vadd.f32 %v539, %v741
        %v743 = vpop.f32.mrf.mxu0
        %v744 = vpop.f32.mrf.mxu0
        %v745 = vadd.f32 %v542, %v744
        %v746 = vpop.f32.mrf.mxu0
        %747 = vmatprep.mubr.bf16.mxu0 0
        %748 = vmatmul.mubr.bf16.gmra.mxu0 %v646
        %v749 = vpop.f32.mrf.mxu0
        %v750 = vadd.f32 %v547, %v749
        %v751 = vpop.f32.mrf.mxu0
        %v752 = vpop.f32.mrf.mxu0
        %v753 = vadd.f32 %v550, %v752
        %v754 = vpop.f32.mrf.mxu0
        %755 = vmatprep.mubr.bf16.mxu0 0
        %756 = vmatmul.mubr.bf16.gmra.mxu0 %v649
        %v757 = vpop.f32.mrf.mxu0
        %v758 = vadd.f32 %v555, %v757
        %v759 = vpop.f32.mrf.mxu0
        %v760 = vpop.f32.mrf.mxu0
        %v761 = vadd.f32 %v558, %v760
        %v762 = vpop.f32.mrf.mxu0
        %763 = vmatprep.mubr.bf16.mxu0 0
        %764 = vmatmul.mubr.bf16.gmra.mxu0 %v652
        %v765 = vpop.f32.mrf.mxu0
        %v766 = vadd.f32 %v563, %v765
        %v767 = vpop.f32.mrf.mxu0
        %v768 = vpop.f32.mrf.mxu0
        %v769 = vadd.f32 %v566, %v768
        %v770 = vpop.f32.mrf.mxu0
        %771 = vmatprep.mubr.bf16.mxu0 0
        %772 = vmatmul.mubr.bf16.gmra.mxu0 %v655
        %v773 = vpop.f32.mrf.mxu0
        %v774 = vadd.f32 %v571, %v773
        %v775 = vpop.f32.mrf.mxu0
        %v776 = vpop.f32.mrf.mxu0
        %v777 = vadd.f32 %v574, %v776
        %v778 = vpop.f32.mrf.mxu0
        %779 = vmatprep.mubr.bf16.mxu0 0
        %780 = vmatmul.mubr.bf16.gmra.mxu0 %v658
        %v781 = vpop.f32.mrf.mxu0
        %v782 = vadd.f32 %v579, %v781
        %v783 = vpop.f32.mrf.mxu0
        %v784 = vpop.f32.mrf.mxu0
        %v785 = vadd.f32 %v582, %v784
        %v786 = vpop.f32.mrf.mxu0
        %787 = vmatprep.mubr.bf16.mxu0 0
        %788 = vmatmul.mubr.bf16.gmra.mxu0 %v661
        %v789 = vpop.f32.mrf.mxu0
        %v790 = vadd.f32 %v587, %v789
        %v791 = vpop.f32.mrf.mxu0
        %v792 = vpop.f32.mrf.mxu0
        %v793 = vadd.f32 %v590, %v792
        %v794 = vpop.f32.mrf.mxu0
        %795 = vmatprep.mubr.bf16.mxu0 0
        %796 = vmatmul.mubr.bf16.gmra.mxu0 %v664
        %v797 = vpop.f32.mrf.mxu0
        %v798 = vadd.f32 %v595, %v797
        %v799 = vpop.f32.mrf.mxu0
        %v800 = vpop.f32.mrf.mxu0
        %v801 = vadd.f32 %v598, %v800
        %v802 = vpop.f32.mrf.mxu0
        %803 = vmatprep.mubr.bf16.mxu0 0
        %804 = vmatmul.mubr.bf16.gmra.mxu0 %v667
        %v805 = vpop.f32.mrf.mxu0
        %v806 = vadd.f32 %v603, %v805
        %v807 = vpop.f32.mrf.mxu0
        %v808 = vpop.f32.mrf.mxu0
        %v809 = vadd.f32 %v606, %v808
        %v810 = vpop.f32.mrf.mxu0
        %811 = vmatprep.mubr.bf16.mxu0 0
        %812 = vmatmul.mubr.bf16.gmra.mxu0 %v670
        %v813 = vpop.f32.mrf.mxu0
        %v814 = vadd.f32 %v611, %v813
        %v815 = vpop.f32.mrf.mxu0
        %v816 = vpop.f32.mrf.mxu0
        %v817 = vpop.f32.mrf.mxu0
        %818 = vdwg.mxu0
        %v819 = vld [vmem:[%s276 + $0x10] sm:$0xc]
        %v820 = vld [vmem:[%s276 + $0x14] sm:$0xf]
        %v821 = vld [vmem:[%s276 + $0x18] sm:$0xf]
        %v822 = vld [vmem:[%s276 + $0x1c] sm:$0xf]
        %v823 = vld [vmem:[%s276 + $0x20] sm:$0xf]
        %v824 = vld [vmem:[%s276 + $0x24] sm:$0xf]
        %v825 = vld [vmem:[%s276 + $0x28] sm:$0xf]
        %v826 = vld [vmem:[%s276 + $0x2c] sm:$0xf]
        %v827 = vld [vmem:[%s276 + $0x30] sm:$0xf]
        %v828 = vld [vmem:[%s276 + $0x34] sm:$0xf]
        %v829 = vld [vmem:[%s276 + $0x38] sm:$0xf]
        %v830 = vld [vmem:[%s276 + $0x3c] sm:$0xf]
        %v831 = vld [vmem:[%s276 + $0x40] sm:$0xf]
        %v832 = vld [vmem:[%s276 + $0x44] sm:$0xf]
        %v833 = vld [vmem:[%s276 + $0x48] sm:$0xf]
        %v834 = vld [vmem:[%s276 + $0x4c] sm:$0xf]
        %v835 = vld [vmem:[%s276 + $0x50] sm:$0xf]
        %v836 = vld [vmem:[%s276 + $0x54] sm:$0xf]
        %v837 = vld [vmem:[%s276 + $0x58] sm:$0xf]
        %v838 = vld [vmem:[%s276 + $0x5c] sm:$0xf]
        %v839 = vld [vmem:[%s276 + $0x60] sm:$0xf]
        %v840 = vld [vmem:[%s276 + $0x64] sm:$0xf]
        %v841 = vld [vmem:[%s276 + $0x68] sm:$0xf]
        %v842 = vld [vmem:[%s276 + $0x6c] sm:$0xf]
        %v843 = vld [vmem:[%s276 + $0x70] sm:$0xf]
        %v844 = vld [vmem:[%s276 + $0x74] sm:$0xf]
        %v845 = vld [vmem:[%s276 + $0x78] sm:$0xf]
        %v846 = vld [vmem:[%s276 + $0x7c] sm:$0x3]
        %s847 = sadd.s32 %s306, 2
        %s848 = smul.u32 %s847, 2
        %s849 = smul.addr %s848, 4
        %s850 = scalar_lea.vmem [#allocation3], %s849
        %v851 = vld [vmem:[%s850] sm:$0xf]
        %v852 = vld [vmem:[%s850 + $0x4] sm:$0x3]
        %v881 = vunpack.c.l.b16 %v819
        %v882 = vunpack.c.l.b16 %v820
        %v883 = vunpack.c.l.b16 %v821
        %v884 = vunpack.c.l.b16 %v822
        %v885 = vunpack.c.l.b16 %v823
        %v886 = vunpack.c.l.b16 %v824
        %v887 = vunpack.c.l.b16 %v825
        %v888 = vunpack.c.l.b16 %v826
        %v889 = vunpack.c.l.b16 %v827
        %v890 = vunpack.c.l.b16 %v828
        %v891 = vunpack.c.l.b16 %v829
        %v892 = vunpack.c.l.b16 %v830
        %v893 = vunpack.c.l.b16 %v831
        %v894 = vunpack.c.l.b16 %v832
        %v895 = vunpack.c.l.b16 %v833
        %v896 = vunpack.c.l.b16 %v834
        %v897 = vunpack.c.l.b16 %v835
        %v898 = vunpack.c.l.b16 %v836
        %v899 = vunpack.c.l.b16 %v837
        %v900 = vunpack.c.l.b16 %v838
        %v901 = vunpack.c.l.b16 %v839
        %v902 = vunpack.c.l.b16 %v840
        %v903 = vunpack.c.l.b16 %v841
        %v904 = vunpack.c.l.b16 %v842
        %v905 = vunpack.c.l.b16 %v843
        %v906 = vunpack.c.l.b16 %v844
        %v907 = vunpack.c.l.b16 %v845
        %v908 = vunpack.c.l.b16 %v846
        %v909 = vpack.c.b16 %v882, %v881
        %v910 = vpack.c.b16 %v884, %v883
        %v911 = vpack.c.b16 %v886, %v885
        %v912 = vpack.c.b16 %v888, %v887
        %v913 = vpack.c.b16 %v890, %v889
        %v914 = vpack.c.b16 %v892, %v891
        %v915 = vpack.c.b16 %v894, %v893
        %v916 = vpack.c.b16 %v896, %v895
        %v917 = vpack.c.b16 %v898, %v897
        %v918 = vpack.c.b16 %v900, %v899
        %v919 = vpack.c.b16 %v902, %v901
        %v920 = vpack.c.b16 %v904, %v903
        %v921 = vpack.c.b16 %v906, %v905
        %v922 = vpack.c.b16 %v908, %v907
        %vm923 = vcmask 1045504
        %v924 = vrot.slane %v909, 2
        %v925 = vrot.slane %v910, 2
        %v926 = vsel %vm923, %v924, %v925
        %v927 = vrot.slane %v911, 2
        %v928 = vsel %vm923, %v925, %v927
        %v929 = vrot.slane %v912, 2
        %v930 = vsel %vm923, %v927, %v929
        %v931 = vrot.slane %v913, 2
        %v932 = vsel %vm923, %v929, %v931
        %v933 = vrot.slane %v914, 2
        %v934 = vsel %vm923, %v931, %v933
        %v935 = vrot.slane %v915, 2
        %v936 = vsel %vm923, %v933, %v935
        %v937 = vrot.slane %v916, 2
        %v938 = vsel %vm923, %v935, %v937
        %v939 = vrot.slane %v917, 2
        %v940 = vsel %vm923, %v937, %v939
        %v941 = vrot.slane %v918, 2
        %v942 = vsel %vm923, %v939, %v941
        %v943 = vrot.slane %v919, 2
        %v944 = vsel %vm923, %v941, %v943
        %v945 = vrot.slane %v920, 2
        %v946 = vsel %vm923, %v943, %v945
        %v947 = vrot.slane %v921, 2
        %v948 = vsel %vm923, %v945, %v947
        %v949 = vrot.slane %v922, 2
        %v950 = vsel %vm923, %v947, %v949
        %v953 = vunpack.c.l.b16 %v851
        %v954 = vunpack.c.l.b16 %v852
        %v955 = vpack.c.b16 %v954, %v953
        %v957 = vsel %vm425, %v926, 0
        %v960 = vsel %vm425, %v928, 0
        %v963 = vsel %vm425, %v930, 0
        %v966 = vsel %vm425, %v932, 0
        %v969 = vsel %vm425, %v934, 0
        %v972 = vsel %vm425, %v936, 0
        %v975 = vsel %vm425, %v938, 0
        %v978 = vsel %vm425, %v940, 0
        %v981 = vsel %vm425, %v942, 0
        %v984 = vsel %vm425, %v944, 0
        %v987 = vsel %vm425, %v946, 0
        %v990 = vsel %vm425, %v948, 0
        %v993 = vsel %vm425, %v950, 0
        %v996 = vsel %vm425, %v949, 0
        %v999 = vsel %vm468, %v955, 0
        %1001 = vmatprep.subr.bf16.mxu0 0
        %1002 = vmatpush1.bf16.msra.mxu0 0
        %1003 = vmatprep.subr.bf16.mxu0 0
        %1004 = vmatpush1.bf16.msra.mxu0 0
        %1005 = vmatprep.subr.bf16.mxu0 0
        %1006 = vmatpush1.bf16.msra.mxu0 0
        %1007 = vmatprep.subr.bf16.mxu0 0
        %1008 = vmatpush1.bf16.msra.mxu0 0
        %1009 = vmatprep.subr.bf16.mxu0 0
        %1010 = vmatpush1.bf16.msra.mxu0 0
        %1011 = vmatprep.subr.bf16.mxu0 0
        %1012 = vmatpush1.bf16.msra.mxu0 0
        %1013 = vmatprep.subr.bf16.mxu0 0
        %1014 = vmatpush1.bf16.msra.mxu0 0
        %1015 = vmatprep.subr.bf16.mxu0 0
        %1016 = vmatpush1.bf16.msra.mxu0 %v999
        %1017 = vmatprep.subr.bf16.mxu0 0
        %1018 = vmatpush2.bf16.msra.mxu0 0
        %1019 = vmatprep.subr.bf16.mxu0 0
        %1020 = vmatpush2.bf16.msra.mxu0 0
        %1021 = vmatprep.subr.bf16.mxu0 0
        %1022 = vmatpush2.bf16.msra.mxu0 0
        %1023 = vmatprep.subr.bf16.mxu0 0
        %1024 = vmatpush2.bf16.msra.mxu0 0
        %1025 = vmatprep.subr.bf16.mxu0 0
        %1026 = vmatpush2.bf16.msra.mxu0 0
        %1027 = vmatprep.subr.bf16.mxu0 0
        %1028 = vmatpush2.bf16.msra.mxu0 0
        %1029 = vmatprep.subr.bf16.mxu0 0
        %1030 = vmatpush2.bf16.msra.mxu0 0
        %1031 = vmatprep.subr.bf16.mxu0 0
        %1032 = vmatpush2.bf16.msra.mxu0 0
        %1033 = vmatprep.mubr.bf16.mxu0 0
        %1034 = vmatmul.mubr.bf16.gmra.mxu0 %v957
        %v1035 = vpop.f32.mrf.mxu0
        %v1036 = vadd.f32 0.0, %v1035
        %v1037 = vpop.f32.mrf.mxu0
        %v1038 = vpop.f32.mrf.mxu0
        %v1039 = vadd.f32 0.0, %v1038
        %v1040 = vpop.f32.mrf.mxu0
        %1041 = vmatprep.mubr.bf16.mxu0 0
        %1042 = vmatmul.mubr.bf16.gmra.mxu0 %v960
        %v1043 = vpop.f32.mrf.mxu0
        %v1044 = vadd.f32 0.0, %v1043
        %v1045 = vpop.f32.mrf.mxu0
        %v1046 = vpop.f32.mrf.mxu0
        %v1047 = vadd.f32 0.0, %v1046
        %v1048 = vpop.f32.mrf.mxu0
        %1049 = vmatprep.mubr.bf16.mxu0 0
        %1050 = vmatmul.mubr.bf16.gmra.mxu0 %v963
        %v1051 = vpop.f32.mrf.mxu0
        %v1052 = vadd.f32 0.0, %v1051
        %v1053 = vpop.f32.mrf.mxu0
        %v1054 = vpop.f32.mrf.mxu0
        %v1055 = vadd.f32 0.0, %v1054
        %v1056 = vpop.f32.mrf.mxu0
        %1057 = vmatprep.mubr.bf16.mxu0 0
        %1058 = vmatmul.mubr.bf16.gmra.mxu0 %v966
        %v1059 = vpop.f32.mrf.mxu0
        %v1060 = vadd.f32 0.0, %v1059
        %v1061 = vpop.f32.mrf.mxu0
        %v1062 = vpop.f32.mrf.mxu0
        %v1063 = vadd.f32 0.0, %v1062
        %v1064 = vpop.f32.mrf.mxu0
        %1065 = vmatprep.mubr.bf16.mxu0 0
        %1066 = vmatmul.mubr.bf16.gmra.mxu0 %v969
        %v1067 = vpop.f32.mrf.mxu0
        %v1068 = vadd.f32 0.0, %v1067
        %v1069 = vpop.f32.mrf.mxu0
        %v1070 = vpop.f32.mrf.mxu0
        %v1071 = vadd.f32 0.0, %v1070
        %v1072 = vpop.f32.mrf.mxu0
        %1073 = vmatprep.mubr.bf16.mxu0 0
        %1074 = vmatmul.mubr.bf16.gmra.mxu0 %v972
        %v1075 = vpop.f32.mrf.mxu0
        %v1076 = vadd.f32 0.0, %v1075
        %v1077 = vpop.f32.mrf.mxu0
        %v1078 = vpop.f32.mrf.mxu0
        %v1079 = vadd.f32 0.0, %v1078
        %v1080 = vpop.f32.mrf.mxu0
        %1081 = vmatprep.mubr.bf16.mxu0 0
        %1082 = vmatmul.mubr.bf16.gmra.mxu0 %v975
        %v1083 = vpop.f32.mrf.mxu0
        %v1084 = vadd.f32 0.0, %v1083
        %v1085 = vpop.f32.mrf.mxu0
        %v1086 = vpop.f32.mrf.mxu0
        %v1087 = vadd.f32 0.0, %v1086
        %v1088 = vpop.f32.mrf.mxu0
        %1089 = vmatprep.mubr.bf16.mxu0 0
        %1090 = vmatmul.mubr.bf16.gmra.mxu0 %v978
        %v1091 = vpop.f32.mrf.mxu0
        %v1092 = vadd.f32 0.0, %v1091
        %v1093 = vpop.f32.mrf.mxu0
        %v1094 = vpop.f32.mrf.mxu0
        %v1095 = vadd.f32 0.0, %v1094
        %v1096 = vpop.f32.mrf.mxu0
        %1097 = vmatprep.mubr.bf16.mxu0 0
        %1098 = vmatmul.mubr.bf16.gmra.mxu0 %v981
        %v1099 = vpop.f32.mrf.mxu0
        %v1100 = vadd.f32 0.0, %v1099
        %v1101 = vpop.f32.mrf.mxu0
        %v1102 = vpop.f32.mrf.mxu0
        %v1103 = vadd.f32 0.0, %v1102
        %v1104 = vpop.f32.mrf.mxu0
        %1105 = vmatprep.mubr.bf16.mxu0 0
        %1106 = vmatmul.mubr.bf16.gmra.mxu0 %v984
        %v1107 = vpop.f32.mrf.mxu0
        %v1108 = vadd.f32 0.0, %v1107
        %v1109 = vpop.f32.mrf.mxu0
        %v1110 = vpop.f32.mrf.mxu0
        %v1111 = vadd.f32 0.0, %v1110
        %v1112 = vpop.f32.mrf.mxu0
        %1113 = vmatprep.mubr.bf16.mxu0 0
        %1114 = vmatmul.mubr.bf16.gmra.mxu0 %v987
        %v1115 = vpop.f32.mrf.mxu0
        %v1116 = vadd.f32 0.0, %v1115
        %v1117 = vpop.f32.mrf.mxu0
        %v1118 = vpop.f32.mrf.mxu0
        %v1119 = vadd.f32 0.0, %v1118
        %v1120 = vpop.f32.mrf.mxu0
        %1121 = vmatprep.mubr.bf16.mxu0 0
        %1122 = vmatmul.mubr.bf16.gmra.mxu0 %v990
        %v1123 = vpop.f32.mrf.mxu0
        %v1124 = vadd.f32 0.0, %v1123
        %v1125 = vpop.f32.mrf.mxu0
        %v1126 = vpop.f32.mrf.mxu0
        %v1127 = vadd.f32 0.0, %v1126
        %v1128 = vpop.f32.mrf.mxu0
        %1129 = vmatprep.mubr.bf16.mxu0 0
        %1130 = vmatmul.mubr.bf16.gmra.mxu0 %v993
        %v1131 = vpop.f32.mrf.mxu0
        %v1132 = vadd.f32 0.0, %v1131
        %v1133 = vpop.f32.mrf.mxu0
        %v1134 = vpop.f32.mrf.mxu0
        %v1135 = vadd.f32 0.0, %v1134
        %v1136 = vpop.f32.mrf.mxu0
        %1137 = vmatprep.mubr.bf16.mxu0 0
        %1138 = vmatmul.mubr.bf16.gmra.mxu0 %v996
        %v1139 = vpop.f32.mrf.mxu0
        %v1140 = vadd.f32 0.0, %v1139
        %v1141 = vpop.f32.mrf.mxu0
        %v1142 = vpop.f32.mrf.mxu0
        %v1143 = vpop.f32.mrf.mxu0
        %1144 = vdwg.mxu0
        %v1145 = vadd.f32 %v710, %v1036
        %v1146 = vadd.f32 %v713, %v1039
        %v1147 = vadd.f32 %v718, %v1044
        %v1148 = vadd.f32 %v721, %v1047
        %v1149 = vadd.f32 %v726, %v1052
        %v1150 = vadd.f32 %v729, %v1055
        %v1151 = vadd.f32 %v734, %v1060
        %v1152 = vadd.f32 %v737, %v1063
        %v1153 = vadd.f32 %v742, %v1068
        %v1154 = vadd.f32 %v745, %v1071
        %v1155 = vadd.f32 %v750, %v1076
        %v1156 = vadd.f32 %v753, %v1079
        %v1157 = vadd.f32 %v758, %v1084
        %v1158 = vadd.f32 %v761, %v1087
        %v1159 = vadd.f32 %v766, %v1092
        %v1160 = vadd.f32 %v769, %v1095
        %v1161 = vadd.f32 %v774, %v1100
        %v1162 = vadd.f32 %v777, %v1103
        %v1163 = vadd.f32 %v782, %v1108
        %v1164 = vadd.f32 %v785, %v1111
        %v1165 = vadd.f32 %v790, %v1116
        %v1166 = vadd.f32 %v793, %v1119
        %v1167 = vadd.f32 %v798, %v1124
        %v1168 = vadd.f32 %v801, %v1127
        %v1169 = vadd.f32 %v806, %v1132
        %v1170 = vadd.f32 %v809, %v1135
        %v1171 = vadd.f32 %v814, %v1140
        %p1172 = scmp.eq.s32.totalorder %s27, 0
        // Predicated region
        $region49: #{tpu_custom_call.1} parent=35 // pred_check
          %p1173 = pneg %p1172
        $region50: #{tpu_custom_call.1} parent=35 // pred_check_branch
          %1175 = sbr.rel (%p1173) target = $region52
        $region51: #{tpu_custom_call.1} parent=35 // pred_region
          %1176 = vst [vmem:[#allocation2] sm:$0xff] %v1145
          %1177 = vst [vmem:[#allocation2 + $0x8] sm:$0xff] %v1146
          %1178 = vst [vmem:[#allocation2 + $0x10] sm:$0xff] %v1147
          %1179 = vst [vmem:[#allocation2 + $0x18] sm:$0xff] %v1148
          %1180 = vst [vmem:[#allocation2 + $0x20] sm:$0xff] %v1149
          %1181 = vst [vmem:[#allocation2 + $0x28] sm:$0xff] %v1150
          %1182 = vst [vmem:[#allocation2 + $0x30] sm:$0xff] %v1151
          %1183 = vst [vmem:[#allocation2 + $0x38] sm:$0xff] %v1152
          %1184 = vst [vmem:[#allocation2 + $0x40] sm:$0xff] %v1153
          %1185 = vst [vmem:[#allocation2 + $0x48] sm:$0xff] %v1154
          %1186 = vst [vmem:[#allocation2 + $0x50] sm:$0xff] %v1155
          %1187 = vst [vmem:[#allocation2 + $0x58] sm:$0xff] %v1156
          %1188 = vst [vmem:[#allocation2 + $0x60] sm:$0xff] %v1157
          %1189 = vst [vmem:[#allocation2 + $0x68] sm:$0xff] %v1158
          %1190 = vst [vmem:[#allocation2 + $0x70] sm:$0xff] %v1159
          %1191 = vst [vmem:[#allocation2 + $0x78] sm:$0xff] %v1160
          %1192 = vst [vmem:[#allocation2 + $0x80] sm:$0xff] %v1161
          %1193 = vst [vmem:[#allocation2 + $0x88] sm:$0xff] %v1162
          %1194 = vst [vmem:[#allocation2 + $0x90] sm:$0xff] %v1163
          %1195 = vst [vmem:[#allocation2 + $0x98] sm:$0xff] %v1164
          %1196 = vst [vmem:[#allocation2 + $0xa0] sm:$0xff] %v1165
          %1197 = vst [vmem:[#allocation2 + $0xa8] sm:$0xff] %v1166
          %1198 = vst [vmem:[#allocation2 + $0xb0] sm:$0xff] %v1167
          %1199 = vst [vmem:[#allocation2 + $0xb8] sm:$0xff] %v1168
          %1200 = vst [vmem:[#allocation2 + $0xc0] sm:$0xff] %v1169
          %1201 = vst [vmem:[#allocation2 + $0xc8] sm:$0xff] %v1170
          %1202 = vst [vmem:[#allocation2 + $0xd0] sm:$0xff] %v1171
        $region52: #{tpu_custom_call.1} parent=35 // pred_fallthru
          _
        %p1203 = scmp.ne.s32.totalorder %s27, 0
        // Predicated region
        $region53: #{tpu_custom_call.1} parent=35 // pred_check
          %p1204 = pneg %p1203
        $region54: #{tpu_custom_call.1} parent=35 // pred_check_branch
          %1206 = sbr.rel (%p1204) target = $region56
        $region55: #{tpu_custom_call.1} parent=35 // pred_region
          %v1207 = vld [vmem:[#allocation2] sm:$0xff]
          %v1208 = vld [vmem:[#allocation2 + $0x8] sm:$0xff]
          %v1209 = vld [vmem:[#allocation2 + $0x10] sm:$0xff]
          %v1210 = vld [vmem:[#allocation2 + $0x18] sm:$0xff]
          %v1211 = vld [vmem:[#allocation2 + $0x20] sm:$0xff]
          %v1212 = vld [vmem:[#allocation2 + $0x28] sm:$0xff]
          %v1213 = vld [vmem:[#allocation2 + $0x30] sm:$0xff]
          %v1214 = vld [vmem:[#allocation2 + $0x38] sm:$0xff]
          %v1215 = vld [vmem:[#allocation2 + $0x40] sm:$0xff]
          %v1216 = vld [vmem:[#allocation2 + $0x48] sm:$0xff]
          %v1217 = vld [vmem:[#allocation2 + $0x50] sm:$0xff]
          %v1218 = vld [vmem:[#allocation2 + $0x58] sm:$0xff]
          %v1219 = vld [vmem:[#allocation2 + $0x60] sm:$0xff]
          %v1220 = vld [vmem:[#allocation2 + $0x68] sm:$0xff]
          %v1221 = vld [vmem:[#allocation2 + $0x70] sm:$0xff]
          %v1222 = vld [vmem:[#allocation2 + $0x78] sm:$0xff]
          %v1223 = vld [vmem:[#allocation2 + $0x80] sm:$0xff]
          %v1224 = vld [vmem:[#allocation2 + $0x88] sm:$0xff]
          %v1225 = vld [vmem:[#allocation2 + $0x90] sm:$0xff]
          %v1226 = vld [vmem:[#allocation2 + $0x98] sm:$0xff]
          %v1227 = vld [vmem:[#allocation2 + $0xa0] sm:$0xff]
          %v1228 = vld [vmem:[#allocation2 + $0xa8] sm:$0xff]
          %v1229 = vld [vmem:[#allocation2 + $0xb0] sm:$0xff]
          %v1230 = vld [vmem:[#allocation2 + $0xb8] sm:$0xff]
          %v1231 = vld [vmem:[#allocation2 + $0xc0] sm:$0xff]
          %v1232 = vld [vmem:[#allocation2 + $0xc8] sm:$0xff]
          %v1233 = vld [vmem:[#allocation2 + $0xd0] sm:$0xff]
          %v1234 = vadd.f32 %v1207, %v1145
          %v1235 = vadd.f32 %v1208, %v1146
          %v1236 = vadd.f32 %v1209, %v1147
          %v1237 = vadd.f32 %v1210, %v1148
          %v1238 = vadd.f32 %v1211, %v1149
          %v1239 = vadd.f32 %v1212, %v1150
          %v1240 = vadd.f32 %v1213, %v1151
          %v1241 = vadd.f32 %v1214, %v1152
          %v1242 = vadd.f32 %v1215, %v1153
          %v1243 = vadd.f32 %v1216, %v1154
          %v1244 = vadd.f32 %v1217, %v1155
          %v1245 = vadd.f32 %v1218, %v1156
          %v1246 = vadd.f32 %v1219, %v1157
          %v1247 = vadd.f32 %v1220, %v1158
          %v1248 = vadd.f32 %v1221, %v1159
          %v1249 = vadd.f32 %v1222, %v1160
          %v1250 = vadd.f32 %v1223, %v1161
          %v1251 = vadd.f32 %v1224, %v1162
          %v1252 = vadd.f32 %v1225, %v1163
          %v1253 = vadd.f32 %v1226, %v1164
          %v1254 = vadd.f32 %v1227, %v1165
          %v1255 = vadd.f32 %v1228, %v1166
          %v1256 = vadd.f32 %v1229, %v1167
          %v1257 = vadd.f32 %v1230, %v1168
          %v1258 = vadd.f32 %v1231, %v1169
          %v1259 = vadd.f32 %v1232, %v1170
          %v1260 = vadd.f32 %v1233, %v1171
          %1261 = vst [vmem:[#allocation2] sm:$0xff] %v1234
          %1262 = vst [vmem:[#allocation2 + $0x8] sm:$0xff] %v1235
          %1263 = vst [vmem:[#allocation2 + $0x10] sm:$0xff] %v1236
          %1264 = vst [vmem:[#allocation2 + $0x18] sm:$0xff] %v1237
          %1265 = vst [vmem:[#allocation2 + $0x20] sm:$0xff] %v1238
          %1266 = vst [vmem:[#allocation2 + $0x28] sm:$0xff] %v1239
          %1267 = vst [vmem:[#allocation2 + $0x30] sm:$0xff] %v1240
          %1268 = vst [vmem:[#allocation2 + $0x38] sm:$0xff] %v1241
          %1269 = vst [vmem:[#allocation2 + $0x40] sm:$0xff] %v1242
          %1270 = vst [vmem:[#allocation2 + $0x48] sm:$0xff] %v1243
          %1271 = vst [vmem:[#allocation2 + $0x50] sm:$0xff] %v1244
          %1272 = vst [vmem:[#allocation2 + $0x58] sm:$0xff] %v1245
          %1273 = vst [vmem:[#allocation2 + $0x60] sm:$0xff] %v1246
          %1274 = vst [vmem:[#allocation2 + $0x68] sm:$0xff] %v1247
          %1275 = vst [vmem:[#allocation2 + $0x70] sm:$0xff] %v1248
          %1276 = vst [vmem:[#allocation2 + $0x78] sm:$0xff] %v1249
          %1277 = vst [vmem:[#allocation2 + $0x80] sm:$0xff] %v1250
          %1278 = vst [vmem:[#allocation2 + $0x88] sm:$0xff] %v1251
          %1279 = vst [vmem:[#allocation2 + $0x90] sm:$0xff] %v1252
          %1280 = vst [vmem:[#allocation2 + $0x98] sm:$0xff] %v1253
          %1281 = vst [vmem:[#allocation2 + $0xa0] sm:$0xff] %v1254
          %1282 = vst [vmem:[#allocation2 + $0xa8] sm:$0xff] %v1255
          %1283 = vst [vmem:[#allocation2 + $0xb0] sm:$0xff] %v1256
          %1284 = vst [vmem:[#allocation2 + $0xb8] sm:$0xff] %v1257
          %1285 = vst [vmem:[#allocation2 + $0xc0] sm:$0xff] %v1258
          %1286 = vst [vmem:[#allocation2 + $0xc8] sm:$0xff] %v1259
          %1287 = vst [vmem:[#allocation2 + $0xd0] sm:$0xff] %v1260
        $region56: #{tpu_custom_call.1} parent=35 // pred_fallthru
          _
        %p1288 = scmp.eq.s32.totalorder %s27, 2
        // Predicated region
        $region57: #{tpu_custom_call.1} parent=35 // pred_check
          %p1289 = pneg %p1288
        $region58: #{tpu_custom_call.1} parent=35 // pred_check_branch
          %1291 = sbr.rel (%p1289) target = $region60
        $region59: #{tpu_custom_call.1} parent=35 // pred_region
          %v1292 = vld [vmem:[#allocation2] sm:$0xff]
          %v1293 = vld [vmem:[#allocation2 + $0x8] sm:$0xff]
          %v1294 = vld [vmem:[#allocation2 + $0x10] sm:$0xff]
          %v1295 = vld [vmem:[#allocation2 + $0x18] sm:$0xff]
          %v1296 = vld [vmem:[#allocation2 + $0x20] sm:$0xff]
          %v1297 = vld [vmem:[#allocation2 + $0x28] sm:$0xff]
          %v1298 = vld [vmem:[#allocation2 + $0x30] sm:$0xff]
          %v1299 = vld [vmem:[#allocation2 + $0x38] sm:$0xff]
          %v1300 = vld [vmem:[#allocation2 + $0x40] sm:$0xff]
          %v1301 = vld [vmem:[#allocation2 + $0x48] sm:$0xff]
          %v1302 = vld [vmem:[#allocation2 + $0x50] sm:$0xff]
          %v1303 = vld [vmem:[#allocation2 + $0x58] sm:$0xff]
          %v1304 = vld [vmem:[#allocation2 + $0x60] sm:$0xff]
          %v1305 = vld [vmem:[#allocation2 + $0x68] sm:$0xff]
          %v1306 = vld [vmem:[#allocation2 + $0x70] sm:$0xff]
          %v1307 = vld [vmem:[#allocation2 + $0x78] sm:$0xff]
          %v1308 = vld [vmem:[#allocation2 + $0x80] sm:$0xff]
          %v1309 = vld [vmem:[#allocation2 + $0x88] sm:$0xff]
          %v1310 = vld [vmem:[#allocation2 + $0x90] sm:$0xff]
          %v1311 = vld [vmem:[#allocation2 + $0x98] sm:$0xff]
          %v1312 = vld [vmem:[#allocation2 + $0xa0] sm:$0xff]
          %v1313 = vld [vmem:[#allocation2 + $0xa8] sm:$0xff]
          %v1314 = vld [vmem:[#allocation2 + $0xb0] sm:$0xff]
          %v1315 = vld [vmem:[#allocation2 + $0xb8] sm:$0xff]
          %v1316 = vld [vmem:[#allocation2 + $0xc0] sm:$0xff]
          %v1317 = vld [vmem:[#allocation2 + $0xc8] sm:$0xff]
          %v1318 = vld [vmem:[#allocation2 + $0xd0] sm:$0xff]
          %v1319 = vld [vmem:[#allocation6] sm:$0x1]
          %v1321 = vlaneseq
          %v1322 = vshrl.u32 %v1321, 7
          %v1323 = vsub.s32 0, %v1322
          %v1324 = vrot.slane %v1319, %v1323
          %v1326 = vmul.f32 %v1292, %v1324
          %v1327 = vmul.f32 %v1293, %v1324
          %v1328 = vmul.f32 %v1294, %v1324
          %v1329 = vmul.f32 %v1295, %v1324
          %v1330 = vmul.f32 %v1296, %v1324
          %v1331 = vmul.f32 %v1297, %v1324
          %v1332 = vmul.f32 %v1298, %v1324
          %v1333 = vmul.f32 %v1299, %v1324
          %v1334 = vmul.f32 %v1300, %v1324
          %v1335 = vmul.f32 %v1301, %v1324
          %v1336 = vmul.f32 %v1302, %v1324
          %v1337 = vmul.f32 %v1303, %v1324
          %v1338 = vmul.f32 %v1304, %v1324
          %v1339 = vmul.f32 %v1305, %v1324
          %v1340 = vmul.f32 %v1306, %v1324
          %v1341 = vmul.f32 %v1307, %v1324
          %v1342 = vmul.f32 %v1308, %v1324
          %v1343 = vmul.f32 %v1309, %v1324
          %v1344 = vmul.f32 %v1310, %v1324
          %v1345 = vmul.f32 %v1311, %v1324
          %v1346 = vmul.f32 %v1312, %v1324
          %v1347 = vmul.f32 %v1313, %v1324
          %v1348 = vmul.f32 %v1314, %v1324
          %v1349 = vmul.f32 %v1315, %v1324
          %v1350 = vmul.f32 %v1316, %v1324
          %v1351 = vmul.f32 %v1317, %v1324
          %v1352 = vmul.f32 %v1318, %v1324
          %v1353 = vld [vmem:[#allocation8] sm:$0x1]
          %v1355 = vlaneseq
          %v1356 = vshrl.u32 %v1355, 7
          %v1357 = vsub.s32 0, %v1356
          %v1358 = vrot.slane %v1353, %v1357
          %v1360 = vadd.f32 %v1326, %v1358
          %v1361 = vadd.f32 %v1327, %v1358
          %v1362 = vadd.f32 %v1328, %v1358
          %v1363 = vadd.f32 %v1329, %v1358
          %v1364 = vadd.f32 %v1330, %v1358
          %v1365 = vadd.f32 %v1331, %v1358
          %v1366 = vadd.f32 %v1332, %v1358
          %v1367 = vadd.f32 %v1333, %v1358
          %v1368 = vadd.f32 %v1334, %v1358
          %v1369 = vadd.f32 %v1335, %v1358
          %v1370 = vadd.f32 %v1336, %v1358
          %v1371 = vadd.f32 %v1337, %v1358
          %v1372 = vadd.f32 %v1338, %v1358
          %v1373 = vadd.f32 %v1339, %v1358
          %v1374 = vadd.f32 %v1340, %v1358
          %v1375 = vadd.f32 %v1341, %v1358
          %v1376 = vadd.f32 %v1342, %v1358
          %v1377 = vadd.f32 %v1343, %v1358
          %v1378 = vadd.f32 %v1344, %v1358
          %v1379 = vadd.f32 %v1345, %v1358
          %v1380 = vadd.f32 %v1346, %v1358
          %v1381 = vadd.f32 %v1347, %v1358
          %v1382 = vadd.f32 %v1348, %v1358
          %v1383 = vadd.f32 %v1349, %v1358
          %v1384 = vadd.f32 %v1350, %v1358
          %v1385 = vadd.f32 %v1351, %v1358
          %v1386 = vadd.f32 %v1352, %v1358
          %v1387 = vmax.f32 %v1360, 0.0
          %v1388 = vmax.f32 %v1361, 0.0
          %v1389 = vmax.f32 %v1362, 0.0
          %v1390 = vmax.f32 %v1363, 0.0
          %v1391 = vmax.f32 %v1364, 0.0
          %v1392 = vmax.f32 %v1365, 0.0
          %v1393 = vmax.f32 %v1366, 0.0
          %v1394 = vmax.f32 %v1367, 0.0
          %v1395 = vmax.f32 %v1368, 0.0
          %v1396 = vmax.f32 %v1369, 0.0
          %v1397 = vmax.f32 %v1370, 0.0
          %v1398 = vmax.f32 %v1371, 0.0
          %v1399 = vmax.f32 %v1372, 0.0
          %v1400 = vmax.f32 %v1373, 0.0
          %v1401 = vmax.f32 %v1374, 0.0
          %v1402 = vmax.f32 %v1375, 0.0
          %v1403 = vmax.f32 %v1376, 0.0
          %v1404 = vmax.f32 %v1377, 0.0
          %v1405 = vmax.f32 %v1378, 0.0
          %v1406 = vmax.f32 %v1379, 0.0
          %v1407 = vmax.f32 %v1380, 0.0
          %v1408 = vmax.f32 %v1381, 0.0
          %v1409 = vmax.f32 %v1382, 0.0
          %v1410 = vmax.f32 %v1383, 0.0
          %v1411 = vmax.f32 %v1384, 0.0
          %v1412 = vmax.f32 %v1385, 0.0
          %v1413 = vmax.f32 %v1386, 0.0
          %1414 = vst [vmem:[%s266] sm:$0xff] %v1387
          %1415 = vst [vmem:[%s266 + $0x8] sm:$0xff] %v1388
          %1416 = vst [vmem:[%s266 + $0x10] sm:$0xff] %v1389
          %1417 = vst [vmem:[%s266 + $0x18] sm:$0xff] %v1390
          %1418 = vst [vmem:[%s266 + $0x20] sm:$0xff] %v1391
          %1419 = vst [vmem:[%s266 + $0x28] sm:$0xff] %v1392
          %1420 = vst [vmem:[%s266 + $0x30] sm:$0xff] %v1393
          %1421 = vst [vmem:[%s266 + $0x38] sm:$0xff] %v1394
          %1422 = vst [vmem:[%s266 + $0x40] sm:$0xff] %v1395
          %1423 = vst [vmem:[%s266 + $0x48] sm:$0xff] %v1396
          %1424 = vst [vmem:[%s266 + $0x50] sm:$0xff] %v1397
          %1425 = vst [vmem:[%s266 + $0x58] sm:$0xff] %v1398
          %1426 = vst [vmem:[%s266 + $0x60] sm:$0xff] %v1399
          %1427 = vst [vmem:[%s266 + $0x68] sm:$0xff] %v1400
          %1428 = vst [vmem:[%s266 + $0x70] sm:$0xff] %v1401
          %1429 = vst [vmem:[%s266 + $0x78] sm:$0xff] %v1402
          %1430 = vst [vmem:[%s266 + $0x80] sm:$0xff] %v1403
          %1431 = vst [vmem:[%s266 + $0x88] sm:$0xff] %v1404
          %1432 = vst [vmem:[%s266 + $0x90] sm:$0xff] %v1405
          %1433 = vst [vmem:[%s266 + $0x98] sm:$0xff] %v1406
          %1434 = vst [vmem:[%s266 + $0xa0] sm:$0xff] %v1407
          %1435 = vst [vmem:[%s266 + $0xa8] sm:$0xff] %v1408
          %1436 = vst [vmem:[%s266 + $0xb0] sm:$0xff] %v1409
          %1437 = vst [vmem:[%s266 + $0xb8] sm:$0xff] %v1410
          %1438 = vst [vmem:[%s266 + $0xc0] sm:$0xff] %v1411
          %1439 = vst [vmem:[%s266 + $0xc8] sm:$0xff] %v1412
          %1440 = vst [vmem:[%s266 + $0xd0] sm:$0xff] %v1413
        $region60: #{tpu_custom_call.1} parent=35 // pred_fallthru
          _
        %s1441 = sand.u32 %s142, 1
        %s1442 = scalar_lea.sflag [#allocation5], %s1441
        %s1443 = sand.u32 %s142, 1
        %s1444 = smul.addr %s1443, 216
        %s1445 = scalar_lea.vmem [#allocation9], %s1444
        // Predicated region
        $region61: #{tpu_custom_call.1} parent=35 // pred_check
          %p1446 = pneg %p152
        $region62: #{tpu_custom_call.1} parent=35 // pred_check_branch
          %1448 = sbr.rel (%p1446) target = $region64
        $region63: #{tpu_custom_call.1} parent=35 // pred_region
          %s1450 = ssub.s32 3456, 3456
          %1451 = vsyncadd %s1442, %s1450
          %s1452 = smul.addr %s26, 27
          %s1453 = smul.addr %s25, 216
          %s1454 = sadd.s32 %s1452, %s1453
          %s1455 = smul.addr %s1454, 128
          %s1456 = scalar_lea.hbm %s4, %s1455
          %s1457 = sshll.u32 %s1445, 4
          %s1458 = int_to_ptr.vmem [resolvable:$true] %s1457
          %1463 = dma.vmem_to_hbm [thread:$0]  %s1458, 3456, %s1456, %s1442, 128, 128, 8
        $region64: #{tpu_custom_call.1} parent=35 // pred_fallthru
          _
      $region36: #{tpu_custom_call.1} parent=5 // pred_fallthru
        _
      %p1464 = scmp.le.s32.totalorder 2, %s15
      // Predicated region
      $region65: #{tpu_custom_call.1} parent=5 // pred_check
        %p1465 = pneg %p1464
      $region66: #{tpu_custom_call.1} parent=5 // pred_check_branch
        %1467 = sbr.rel (%p1465) target = $region68
      $region67: #{tpu_custom_call.1} parent=5 // pred_region
        %s1468 = ssub.s32 %s15, 2
        // Predicated region
        $region69: #{tpu_custom_call.1} parent=67 // pred_check
          %p1469 = pneg %p158
        $region70: #{tpu_custom_call.1} parent=67 // pred_check_branch
          %1471 = sbr.rel (%p1469) target = $region72
        $region71: #{tpu_custom_call.1} parent=67 // pred_region
          %s1472 = sand.u32 %s143, 1
          %s1473 = scalar_lea.sflag [#allocation5], %s1472
          %s1474 = sand.u32 %s143, 1
          %s1475 = smul.addr %s1474, 216
          %s1476 = scalar_lea.vmem [#allocation9], %s1475
          %1477 = dma.done %s1473, 3456
        $region72: #{tpu_custom_call.1} parent=67 // pred_fallthru
          _
      $region68: #{tpu_custom_call.1} parent=5 // pred_fallthru
        _
    $region6: #{tpu_custom_call.1} parent=1 // loop_footer
      %s19 = sadd.s32 1, %s15
    $region7: #{tpu_custom_call.1} parent=1 // loop_footer_branch
      %14 = sbr.rel target = $region3
    $region8: #{tpu_custom_call.1} parent=1 // loop_exit
      _
    %1478 = vsyncpa [#allocation4], 1
    %s1479 = scalar_lea.sflag [#allocation4], 1
    %1480 = vsyncpa %s1479, 1
    %1481 = vsyncpa [#allocation7], 1
    %1482 = vsyncpa [#allocation5], 1
    %s1483 = scalar_lea.sflag [#allocation5], 1
    %1484 = vsyncpa %s1483, 1

</llo_original>
